<compile_context>
chip_gen: v5e
topology: v5e:2x2
jax: 0.10.0
libtpu: 0.0.40
codegen_flags: <defaults>
</compile_context>

<pallas_src>
import jax
import jax.numpy as jnp
import numpy as np
from jax import lax
from jax.experimental import pallas as pl
from jax.experimental.pallas import tpu as pltpu


def rnn_kernel(x_ref, h0_ref, wih_ref, whht_ref, bias_ref, wout_ref, bout_ref,
               out_ref, hn_ref):
    """Elman RNN (tanh) + per-step Linear head, batch-first in/out.

    x_ref    : (B, S)  inputs (input_size == 1, squeezed in the wrapper)
    h0_ref   : (B, H)  initial hidden state
    wih_ref  : (1, H)  weight_ih_l0 reshaped to a row
    whht_ref : (H, H)  weight_hh_l0 transposed once in the wrapper (W_hh^T)
    bias_ref : (1, H)  bias_ih_l0 + bias_hh_l0 (fused in the wrapper)
    wout_ref : (1, H)  out.weight
    bout_ref : (1, 1)  out.bias
    out_ref  : (B, S)  per-step Linear outputs (batch-first, single dense store)
    hn_ref   : (B, H)  final hidden state
    """
    B, S = x_ref.shape

    xv = x_ref[...]              # (B, S)
    wih = wih_ref[...]           # (1, H)
    whh_t = whht_ref[...]        # (H, H), already W_hh^T
    bias = bias_ref[...]         # (1, H)
    wout = wout_ref[...]         # (1, H)

    lane_t = lax.broadcasted_iota(jnp.int32, (B, S), 1)   # column index per lane
    h = h0_ref[...]              # (B, H)
    y = jnp.zeros((B, S), jnp.float32)

    for t in range(S):           # S is small & static -> fully unrolled
        # Recurrence matmul: the only MXU op, and the only op on the serial chain.
        hh = jnp.dot(h, whh_t, preferred_element_type=jnp.float32,
                     precision=lax.Precision.HIGHEST)
        # K=1 input projection as a VPU broadcast multiply (no degenerate MXU dot).
        xw = xv[:, t:t + 1] * wih                          # (B,1)*(1,H) -> (B,H)
        h = jnp.tanh(xw + bias + hh)                       # EUP tanh
        # N=1 Linear head as a lane reduce (XLU), placed into output column t.
        y_t = jnp.sum(h * wout, axis=1, keepdims=True)     # (B, 1)
        y = y + jnp.where(lane_t == t, y_t, 0.0)           # off-chain VPU filler

    hn_ref[...] = h.astype(hn_ref.dtype)
    out_ref[...] = (y + bout_ref[...]).astype(out_ref.dtype)


def rnn_forward(x, h_state, params):
    """x: (B, S, 1) batch-first, h_state: (1, B, 32). Returns ((B, S, 1), (1, B, 32))."""
    B, S, I = x.shape
    H = params["whh"].shape[0]
    assert I == 1, "module is defined with input_size=1"

    x2d = x.reshape(B, S)                                # free: drop the size-1 input dim
    wih_row = params["wih"].reshape(1, H)                # (H, 1) -> (1, H)
    whh_t = params["whh"].T                              # one-time tiny (32,32) transpose
    bias = (params["bih"] + params["bhh"]).reshape(1, H)
    wout = params["wout"].reshape(1, H)
    bout = params["bout"].reshape(1, 1)

    vmem = pl.BlockSpec(memory_space=pltpu.MemorySpace.VMEM)

    out2d, h_n = pl.pallas_call(
        rnn_kernel,
        out_shape=(jax.ShapeDtypeStruct((B, S), x.dtype),
                   jax.ShapeDtypeStruct((B, H), x.dtype)),
        in_specs=[vmem] * 7,
        out_specs=(vmem, vmem),
    )(x2d, h_state[0], wih_row, whh_t, bias, wout, bout)

    return out2d[:, :, None], h_n[None]


def rnn_reference(x, h_state, params):
    """Pure-JAX reference matching PyTorch nn.RNN + Linear semantics."""
    B, S, I = x.shape
    h = h_state[0]                                       # (B, H)
    bias = params["bih"] + params["bhh"]
    hp = lax.Precision.HIGHEST
    outs = []
    for t in range(S):
        h = jnp.tanh(jnp.dot(x[:, t, :], params["wih"].T, precision=hp)
                     + jnp.dot(h, params["whh"].T, precision=hp) + bias)
        outs.append(jnp.dot(h, params["wout"].T, precision=hp) + params["bout"])
    return jnp.stack(outs, axis=1), h[None]


def init_params(key, input_size=1, hidden=32, out_features=1):
    # Deterministic init (uniform, PyTorch-like scale 1/sqrt(hidden)).
    k = jax.random.split(key, 6)
    s = 1.0 / np.sqrt(hidden)
    return {
        "wih": jax.random.uniform(k[0], (hidden, input_size), jnp.float32, -s, s),
        "whh": jax.random.uniform(k[1], (hidden, hidden), jnp.float32, -s, s),
        "bih": jax.random.uniform(k[2], (hidden,), jnp.float32, -s, s),
        "bhh": jax.random.uniform(k[3], (hidden,), jnp.float32, -s, s),
        "wout": jax.random.uniform(k[4], (out_features, hidden), jnp.float32, -s, s),
        "bout": jax.random.uniform(k[5], (out_features,), jnp.float32, -s, s),
    }


if __name__ == "__main__":
    key = jax.random.PRNGKey(0)
    kx, kh, kp = jax.random.split(key, 3)

    B, S, I, H = 2, 8, 1, 32
    x = jax.random.normal(kx, (B, S, I), jnp.float32)
    h0 = jax.random.normal(kh, (1, B, H), jnp.float32)
    params = init_params(kp, I, H, 1)

    out, h_n = jax.jit(rnn_forward)(x, h0, params)
    out = jax.block_until_ready(out)
    h_n = jax.block_until_ready(h_n)

    out_ref, h_ref = rnn_reference(x, h0, params)
    assert out.shape == (B, S, 1) and h_n.shape == (1, B, H)
    # Tolerance leaves headroom for MXU pass decomposition / tanh impl details;
    # any semantic error (weight orientation, bias, step order) is >= 1e-2.
    np.testing.assert_allclose(np.asarray(out), np.asarray(out_ref), rtol=1e-4, atol=1e-5)
    np.testing.assert_allclose(np.asarray(h_n), np.asarray(h_ref), rtol=1e-4, atol=1e-5)

    print("KERNEL_OK")
</pallas_src>

<mosaic_0001>
module attributes {stable_mosaic.version = 11 : i64} {
  func.func @rnn_kernel(%arg0: memref<2x8xf32, #tpu.memory_space<vmem>>, %arg1: memref<2x32xf32, #tpu.memory_space<vmem>>, %arg2: memref<1x32xf32, #tpu.memory_space<vmem>>, %arg3: memref<32x32xf32, #tpu.memory_space<vmem>>, %arg4: memref<1x32xf32, #tpu.memory_space<vmem>>, %arg5: memref<1x32xf32, #tpu.memory_space<vmem>>, %arg6: memref<1x1xf32, #tpu.memory_space<vmem>>, %arg7: memref<2x8xf32, #tpu.memory_space<vmem>>, %arg8: memref<2x32xf32, #tpu.memory_space<vmem>>) attributes {dimension_semantics = [], scalar_prefetch = 0 : i64, scratch_operands = 0 : i64, tpu.core_type = #tpu.core_type<tc>} {
    %c0 = arith.constant 0 : index
    %c0_0 = arith.constant 0 : index
    %0 = vector.load %arg0[%c0, %c0_0] : memref<2x8xf32, #tpu.memory_space<vmem>>, vector<2x8xf32>
    %c0_1 = arith.constant 0 : index
    %c0_2 = arith.constant 0 : index
    %1 = vector.load %arg2[%c0_1, %c0_2] : memref<1x32xf32, #tpu.memory_space<vmem>>, vector<1x32xf32>
    %c0_3 = arith.constant 0 : index
    %c0_4 = arith.constant 0 : index
    %2 = vector.load %arg3[%c0_3, %c0_4] : memref<32x32xf32, #tpu.memory_space<vmem>>, vector<32x32xf32>
    %c0_5 = arith.constant 0 : index
    %c0_6 = arith.constant 0 : index
    %3 = vector.load %arg4[%c0_5, %c0_6] : memref<1x32xf32, #tpu.memory_space<vmem>>, vector<1x32xf32>
    %c0_7 = arith.constant 0 : index
    %c0_8 = arith.constant 0 : index
    %4 = vector.load %arg5[%c0_7, %c0_8] : memref<1x32xf32, #tpu.memory_space<vmem>>, vector<1x32xf32>
    %5 = tpu.iota {dimensions = array<i32: 1>} : vector<2x8xi32>
    %c0_9 = arith.constant 0 : index
    %c0_10 = arith.constant 0 : index
    %6 = vector.load %arg1[%c0_9, %c0_10] : memref<2x32xf32, #tpu.memory_space<vmem>>, vector<2x32xf32>
    %cst = arith.constant 0.000000e+00 : f32
    %7 = vector.broadcast %cst : f32 to vector<2x8xf32>
    %cst_11 = arith.constant dense<0.000000e+00> : vector<2x32xf32>
    %8 = tpu.matmul %6, %2, %cst_11 {dimension_numbers = #tpu.dot_dimension_numbers<[1], [0], [0], [1], [0, 0, 1, 1], [], []>, precision = #tpu.contract_precision<fp32>} : vector<2x32xf32>, vector<32x32xf32>, vector<2x32xf32> -> vector<2x32xf32>
    %9 = vector.extract_strided_slice %0 {offsets = [0, 0], sizes = [2, 1], strides = [1, 1]} : vector<2x8xf32> to vector<2x1xf32>
    %10 = vector.broadcast %9 : vector<2x1xf32> to vector<2x32xf32>
    %11 = vector.broadcast %1 : vector<1x32xf32> to vector<2x32xf32>
    %12 = arith.mulf %10, %11 : vector<2x32xf32>
    %13 = vector.broadcast %3 : vector<1x32xf32> to vector<2x32xf32>
    %14 = arith.addf %12, %13 : vector<2x32xf32>
    %15 = arith.addf %14, %8 : vector<2x32xf32>
    %16 = math.tanh %15 : vector<2x32xf32>
    %17 = vector.broadcast %4 : vector<1x32xf32> to vector<2x32xf32>
    %18 = arith.mulf %16, %17 : vector<2x32xf32>
    %cst_12 = arith.constant dense<0.000000e+00> : vector<2xf32>
    %19 = vector.multi_reduction <add>, %18, %cst_12 [1] : vector<2x32xf32> to vector<2xf32>
    %20 = vector.shape_cast %19 : vector<2xf32> to vector<2x1xf32>
    %c0_i32 = arith.constant 0 : i32
    %21 = vector.broadcast %c0_i32 : i32 to vector<2x8xi32>
    %22 = arith.cmpi eq, %5, %21 : vector<2x8xi32>
    %cst_13 = arith.constant 0.000000e+00 : f32
    %23 = vector.shape_cast %20 : vector<2x1xf32> to vector<2x1xf32>
    %24 = vector.broadcast %23 : vector<2x1xf32> to vector<2x8xf32>
    %25 = vector.broadcast %cst_13 : f32 to vector<2x8xf32>
    %26 = arith.select %22, %24, %25 : vector<2x8xi1>, vector<2x8xf32>
    %27 = arith.addf %7, %26 : vector<2x8xf32>
    %cst_14 = arith.constant dense<0.000000e+00> : vector<2x32xf32>
    %28 = tpu.matmul %16, %2, %cst_14 {dimension_numbers = #tpu.dot_dimension_numbers<[1], [0], [0], [1], [0, 0, 1, 1], [], []>, precision = #tpu.contract_precision<fp32>} : vector<2x32xf32>, vector<32x32xf32>, vector<2x32xf32> -> vector<2x32xf32>
    %29 = vector.extract_strided_slice %0 {offsets = [0, 1], sizes = [2, 1], strides = [1, 1]} : vector<2x8xf32> to vector<2x1xf32>
    %30 = vector.broadcast %29 : vector<2x1xf32> to vector<2x32xf32>
    %31 = vector.broadcast %1 : vector<1x32xf32> to vector<2x32xf32>
    %32 = arith.mulf %30, %31 : vector<2x32xf32>
    %33 = vector.broadcast %3 : vector<1x32xf32> to vector<2x32xf32>
    %34 = arith.addf %32, %33 : vector<2x32xf32>
    %35 = arith.addf %34, %28 : vector<2x32xf32>
    %36 = math.tanh %35 : vector<2x32xf32>
    %37 = vector.broadcast %4 : vector<1x32xf32> to vector<2x32xf32>
    %38 = arith.mulf %36, %37 : vector<2x32xf32>
    %cst_15 = arith.constant dense<0.000000e+00> : vector<2xf32>
    %39 = vector.multi_reduction <add>, %38, %cst_15 [1] : vector<2x32xf32> to vector<2xf32>
    %40 = vector.shape_cast %39 : vector<2xf32> to vector<2x1xf32>
    %c1_i32 = arith.constant 1 : i32
    %41 = vector.broadcast %c1_i32 : i32 to vector<2x8xi32>
    %42 = arith.cmpi eq, %5, %41 : vector<2x8xi32>
    %cst_16 = arith.constant 0.000000e+00 : f32
    %43 = vector.shape_cast %40 : vector<2x1xf32> to vector<2x1xf32>
    %44 = vector.broadcast %43 : vector<2x1xf32> to vector<2x8xf32>
    %45 = vector.broadcast %cst_16 : f32 to vector<2x8xf32>
    %46 = arith.select %42, %44, %45 : vector<2x8xi1>, vector<2x8xf32>
    %47 = arith.addf %27, %46 : vector<2x8xf32>
    %cst_17 = arith.constant dense<0.000000e+00> : vector<2x32xf32>
    %48 = tpu.matmul %36, %2, %cst_17 {dimension_numbers = #tpu.dot_dimension_numbers<[1], [0], [0], [1], [0, 0, 1, 1], [], []>, precision = #tpu.contract_precision<fp32>} : vector<2x32xf32>, vector<32x32xf32>, vector<2x32xf32> -> vector<2x32xf32>
    %49 = vector.extract_strided_slice %0 {offsets = [0, 2], sizes = [2, 1], strides = [1, 1]} : vector<2x8xf32> to vector<2x1xf32>
    %50 = vector.broadcast %49 : vector<2x1xf32> to vector<2x32xf32>
    %51 = vector.broadcast %1 : vector<1x32xf32> to vector<2x32xf32>
    %52 = arith.mulf %50, %51 : vector<2x32xf32>
    %53 = vector.broadcast %3 : vector<1x32xf32> to vector<2x32xf32>
    %54 = arith.addf %52, %53 : vector<2x32xf32>
    %55 = arith.addf %54, %48 : vector<2x32xf32>
    %56 = math.tanh %55 : vector<2x32xf32>
    %57 = vector.broadcast %4 : vector<1x32xf32> to vector<2x32xf32>
    %58 = arith.mulf %56, %57 : vector<2x32xf32>
    %cst_18 = arith.constant dense<0.000000e+00> : vector<2xf32>
    %59 = vector.multi_reduction <add>, %58, %cst_18 [1] : vector<2x32xf32> to vector<2xf32>
    %60 = vector.shape_cast %59 : vector<2xf32> to vector<2x1xf32>
    %c2_i32 = arith.constant 2 : i32
    %61 = vector.broadcast %c2_i32 : i32 to vector<2x8xi32>
    %62 = arith.cmpi eq, %5, %61 : vector<2x8xi32>
    %cst_19 = arith.constant 0.000000e+00 : f32
    %63 = vector.shape_cast %60 : vector<2x1xf32> to vector<2x1xf32>
    %64 = vector.broadcast %63 : vector<2x1xf32> to vector<2x8xf32>
    %65 = vector.broadcast %cst_19 : f32 to vector<2x8xf32>
    %66 = arith.select %62, %64, %65 : vector<2x8xi1>, vector<2x8xf32>
    %67 = arith.addf %47, %66 : vector<2x8xf32>
    %cst_20 = arith.constant dense<0.000000e+00> : vector<2x32xf32>
    %68 = tpu.matmul %56, %2, %cst_20 {dimension_numbers = #tpu.dot_dimension_numbers<[1], [0], [0], [1], [0, 0, 1, 1], [], []>, precision = #tpu.contract_precision<fp32>} : vector<2x32xf32>, vector<32x32xf32>, vector<2x32xf32> -> vector<2x32xf32>
    %69 = vector.extract_strided_slice %0 {offsets = [0, 3], sizes = [2, 1], strides = [1, 1]} : vector<2x8xf32> to vector<2x1xf32>
    %70 = vector.broadcast %69 : vector<2x1xf32> to vector<2x32xf32>
    %71 = vector.broadcast %1 : vector<1x32xf32> to vector<2x32xf32>
    %72 = arith.mulf %70, %71 : vector<2x32xf32>
    %73 = vector.broadcast %3 : vector<1x32xf32> to vector<2x32xf32>
    %74 = arith.addf %72, %73 : vector<2x32xf32>
    %75 = arith.addf %74, %68 : vector<2x32xf32>
    %76 = math.tanh %75 : vector<2x32xf32>
    %77 = vector.broadcast %4 : vector<1x32xf32> to vector<2x32xf32>
    %78 = arith.mulf %76, %77 : vector<2x32xf32>
    %cst_21 = arith.constant dense<0.000000e+00> : vector<2xf32>
    %79 = vector.multi_reduction <add>, %78, %cst_21 [1] : vector<2x32xf32> to vector<2xf32>
    %80 = vector.shape_cast %79 : vector<2xf32> to vector<2x1xf32>
    %c3_i32 = arith.constant 3 : i32
    %81 = vector.broadcast %c3_i32 : i32 to vector<2x8xi32>
    %82 = arith.cmpi eq, %5, %81 : vector<2x8xi32>
    %cst_22 = arith.constant 0.000000e+00 : f32
    %83 = vector.shape_cast %80 : vector<2x1xf32> to vector<2x1xf32>
    %84 = vector.broadcast %83 : vector<2x1xf32> to vector<2x8xf32>
    %85 = vector.broadcast %cst_22 : f32 to vector<2x8xf32>
    %86 = arith.select %82, %84, %85 : vector<2x8xi1>, vector<2x8xf32>
    %87 = arith.addf %67, %86 : vector<2x8xf32>
    %cst_23 = arith.constant dense<0.000000e+00> : vector<2x32xf32>
    %88 = tpu.matmul %76, %2, %cst_23 {dimension_numbers = #tpu.dot_dimension_numbers<[1], [0], [0], [1], [0, 0, 1, 1], [], []>, precision = #tpu.contract_precision<fp32>} : vector<2x32xf32>, vector<32x32xf32>, vector<2x32xf32> -> vector<2x32xf32>
    %89 = vector.extract_strided_slice %0 {offsets = [0, 4], sizes = [2, 1], strides = [1, 1]} : vector<2x8xf32> to vector<2x1xf32>
    %90 = vector.broadcast %89 : vector<2x1xf32> to vector<2x32xf32>
    %91 = vector.broadcast %1 : vector<1x32xf32> to vector<2x32xf32>
    %92 = arith.mulf %90, %91 : vector<2x32xf32>
    %93 = vector.broadcast %3 : vector<1x32xf32> to vector<2x32xf32>
    %94 = arith.addf %92, %93 : vector<2x32xf32>
    %95 = arith.addf %94, %88 : vector<2x32xf32>
    %96 = math.tanh %95 : vector<2x32xf32>
    %97 = vector.broadcast %4 : vector<1x32xf32> to vector<2x32xf32>
    %98 = arith.mulf %96, %97 : vector<2x32xf32>
    %cst_24 = arith.constant dense<0.000000e+00> : vector<2xf32>
    %99 = vector.multi_reduction <add>, %98, %cst_24 [1] : vector<2x32xf32> to vector<2xf32>
    %100 = vector.shape_cast %99 : vector<2xf32> to vector<2x1xf32>
    %c4_i32 = arith.constant 4 : i32
    %101 = vector.broadcast %c4_i32 : i32 to vector<2x8xi32>
    %102 = arith.cmpi eq, %5, %101 : vector<2x8xi32>
    %cst_25 = arith.constant 0.000000e+00 : f32
    %103 = vector.shape_cast %100 : vector<2x1xf32> to vector<2x1xf32>
    %104 = vector.broadcast %103 : vector<2x1xf32> to vector<2x8xf32>
    %105 = vector.broadcast %cst_25 : f32 to vector<2x8xf32>
    %106 = arith.select %102, %104, %105 : vector<2x8xi1>, vector<2x8xf32>
    %107 = arith.addf %87, %106 : vector<2x8xf32>
    %cst_26 = arith.constant dense<0.000000e+00> : vector<2x32xf32>
    %108 = tpu.matmul %96, %2, %cst_26 {dimension_numbers = #tpu.dot_dimension_numbers<[1], [0], [0], [1], [0, 0, 1, 1], [], []>, precision = #tpu.contract_precision<fp32>} : vector<2x32xf32>, vector<32x32xf32>, vector<2x32xf32> -> vector<2x32xf32>
    %109 = vector.extract_strided_slice %0 {offsets = [0, 5], sizes = [2, 1], strides = [1, 1]} : vector<2x8xf32> to vector<2x1xf32>
    %110 = vector.broadcast %109 : vector<2x1xf32> to vector<2x32xf32>
    %111 = vector.broadcast %1 : vector<1x32xf32> to vector<2x32xf32>
    %112 = arith.mulf %110, %111 : vector<2x32xf32>
    %113 = vector.broadcast %3 : vector<1x32xf32> to vector<2x32xf32>
    %114 = arith.addf %112, %113 : vector<2x32xf32>
    %115 = arith.addf %114, %108 : vector<2x32xf32>
    %116 = math.tanh %115 : vector<2x32xf32>
    %117 = vector.broadcast %4 : vector<1x32xf32> to vector<2x32xf32>
    %118 = arith.mulf %116, %117 : vector<2x32xf32>
    %cst_27 = arith.constant dense<0.000000e+00> : vector<2xf32>
    %119 = vector.multi_reduction <add>, %118, %cst_27 [1] : vector<2x32xf32> to vector<2xf32>
    %120 = vector.shape_cast %119 : vector<2xf32> to vector<2x1xf32>
    %c5_i32 = arith.constant 5 : i32
    %121 = vector.broadcast %c5_i32 : i32 to vector<2x8xi32>
    %122 = arith.cmpi eq, %5, %121 : vector<2x8xi32>
    %cst_28 = arith.constant 0.000000e+00 : f32
    %123 = vector.shape_cast %120 : vector<2x1xf32> to vector<2x1xf32>
    %124 = vector.broadcast %123 : vector<2x1xf32> to vector<2x8xf32>
    %125 = vector.broadcast %cst_28 : f32 to vector<2x8xf32>
    %126 = arith.select %122, %124, %125 : vector<2x8xi1>, vector<2x8xf32>
    %127 = arith.addf %107, %126 : vector<2x8xf32>
    %cst_29 = arith.constant dense<0.000000e+00> : vector<2x32xf32>
    %128 = tpu.matmul %116, %2, %cst_29 {dimension_numbers = #tpu.dot_dimension_numbers<[1], [0], [0], [1], [0, 0, 1, 1], [], []>, precision = #tpu.contract_precision<fp32>} : vector<2x32xf32>, vector<32x32xf32>, vector<2x32xf32> -> vector<2x32xf32>
    %129 = vector.extract_strided_slice %0 {offsets = [0, 6], sizes = [2, 1], strides = [1, 1]} : vector<2x8xf32> to vector<2x1xf32>
    %130 = vector.broadcast %129 : vector<2x1xf32> to vector<2x32xf32>
    %131 = vector.broadcast %1 : vector<1x32xf32> to vector<2x32xf32>
    %132 = arith.mulf %130, %131 : vector<2x32xf32>
    %133 = vector.broadcast %3 : vector<1x32xf32> to vector<2x32xf32>
    %134 = arith.addf %132, %133 : vector<2x32xf32>
    %135 = arith.addf %134, %128 : vector<2x32xf32>
    %136 = math.tanh %135 : vector<2x32xf32>
    %137 = vector.broadcast %4 : vector<1x32xf32> to vector<2x32xf32>
    %138 = arith.mulf %136, %137 : vector<2x32xf32>
    %cst_30 = arith.constant dense<0.000000e+00> : vector<2xf32>
    %139 = vector.multi_reduction <add>, %138, %cst_30 [1] : vector<2x32xf32> to vector<2xf32>
    %140 = vector.shape_cast %139 : vector<2xf32> to vector<2x1xf32>
    %c6_i32 = arith.constant 6 : i32
    %141 = vector.broadcast %c6_i32 : i32 to vector<2x8xi32>
    %142 = arith.cmpi eq, %5, %141 : vector<2x8xi32>
    %cst_31 = arith.constant 0.000000e+00 : f32
    %143 = vector.shape_cast %140 : vector<2x1xf32> to vector<2x1xf32>
    %144 = vector.broadcast %143 : vector<2x1xf32> to vector<2x8xf32>
    %145 = vector.broadcast %cst_31 : f32 to vector<2x8xf32>
    %146 = arith.select %142, %144, %145 : vector<2x8xi1>, vector<2x8xf32>
    %147 = arith.addf %127, %146 : vector<2x8xf32>
    %cst_32 = arith.constant dense<0.000000e+00> : vector<2x32xf32>
    %148 = tpu.matmul %136, %2, %cst_32 {dimension_numbers = #tpu.dot_dimension_numbers<[1], [0], [0], [1], [0, 0, 1, 1], [], []>, precision = #tpu.contract_precision<fp32>} : vector<2x32xf32>, vector<32x32xf32>, vector<2x32xf32> -> vector<2x32xf32>
    %149 = vector.extract_strided_slice %0 {offsets = [0, 7], sizes = [2, 1], strides = [1, 1]} : vector<2x8xf32> to vector<2x1xf32>
    %150 = vector.broadcast %149 : vector<2x1xf32> to vector<2x32xf32>
    %151 = vector.broadcast %1 : vector<1x32xf32> to vector<2x32xf32>
    %152 = arith.mulf %150, %151 : vector<2x32xf32>
    %153 = vector.broadcast %3 : vector<1x32xf32> to vector<2x32xf32>
    %154 = arith.addf %152, %153 : vector<2x32xf32>
    %155 = arith.addf %154, %148 : vector<2x32xf32>
    %156 = math.tanh %155 : vector<2x32xf32>
    %157 = vector.broadcast %4 : vector<1x32xf32> to vector<2x32xf32>
    %158 = arith.mulf %156, %157 : vector<2x32xf32>
    %cst_33 = arith.constant dense<0.000000e+00> : vector<2xf32>
    %159 = vector.multi_reduction <add>, %158, %cst_33 [1] : vector<2x32xf32> to vector<2xf32>
    %160 = vector.shape_cast %159 : vector<2xf32> to vector<2x1xf32>
    %c7_i32 = arith.constant 7 : i32
    %161 = vector.broadcast %c7_i32 : i32 to vector<2x8xi32>
    %162 = arith.cmpi eq, %5, %161 : vector<2x8xi32>
    %cst_34 = arith.constant 0.000000e+00 : f32
    %163 = vector.shape_cast %160 : vector<2x1xf32> to vector<2x1xf32>
    %164 = vector.broadcast %163 : vector<2x1xf32> to vector<2x8xf32>
    %165 = vector.broadcast %cst_34 : f32 to vector<2x8xf32>
    %166 = arith.select %162, %164, %165 : vector<2x8xi1>, vector<2x8xf32>
    %167 = arith.addf %147, %166 : vector<2x8xf32>
    %c0_35 = arith.constant 0 : index
    %c0_36 = arith.constant 0 : index
    %168 = vector.load %arg8[%c0_35, %c0_36] : memref<2x32xf32, #tpu.memory_space<vmem>>, vector<2x32xf32>
    tpu.vector_store %arg8[%c0_35, %c0_36], %156 {strides = array<i32>} : memref<2x32xf32, #tpu.memory_space<vmem>>, vector<2x32xf32>,
    %c0_37 = arith.constant 0 : index
    %c0_38 = arith.constant 0 : index
    %169 = vector.load %arg6[%c0_37, %c0_38] : memref<1x1xf32, #tpu.memory_space<vmem>>, vector<1x1xf32>
    %170 = vector.broadcast %169 : vector<1x1xf32> to vector<2x8xf32>
    %171 = arith.addf %167, %170 : vector<2x8xf32>
    %c0_39 = arith.constant 0 : index
    %c0_40 = arith.constant 0 : index
    %172 = vector.load %arg7[%c0_39, %c0_40] : memref<2x8xf32, #tpu.memory_space<vmem>>, vector<2x8xf32>
    tpu.vector_store %arg7[%c0_39, %c0_40], %171 {strides = array<i32>} : memref<2x8xf32, #tpu.memory_space<vmem>>, vector<2x8xf32>,
    return
  }
}

</mosaic_0001>

<llo_original>
// kernel: rnn_forward.1
$region0: #{rnn_forward.1}
  #allocation0 [shape = 'u32[]', space=smem, size = 0x4, offset = 0x4, fixed_abs, tag = 'smem constant byte address 0x4 - core index']
  #allocation1 [shape = 'u32[72,128]{1,0:T(1,128)}', space=vmem, size = 0x9000, scoped, tag = 'internal scratch']
  #allocation2 [shape = 'f32[1,1]{1,0:T(1,128)S(1)}', space=vmem, size = 0x200, scoped, tag = 'scoped memory for rnn_forward.1']
  %s0 = inlined_call_operand.vmem [shape: f32[2,8], index: 0, kind: input, shape index: {}]
  %s1 = inlined_call_operand.vmem [shape: f32[2,32], index: 1, kind: input, shape index: {}]
  %s2 = inlined_call_operand.vmem [shape: f32[1,32], index: 2, kind: input, shape index: {}]
  %s3 = inlined_call_operand.vmem [shape: f32[32,32], index: 3, kind: input, shape index: {}]
  %s4 = inlined_call_operand.vmem [shape: f32[1,32], index: 4, kind: input, shape index: {}]
  %s5 = inlined_call_operand.vmem [shape: f32[1,32], index: 5, kind: input, shape index: {}]
  %s6 = inlined_call_operand.<no memory space> [shape: f32[1,1], index: 6, kind: input, shape index: {}]
  %s7 = inlined_call_operand.hbm [shape: f32[2,8], index: 7, kind: output, shape index: {0}]
  %s8 = inlined_call_operand.hbm [shape: f32[2,32], index: 8, kind: output, shape index: {1}]
  %9 = xla_tuple %s7, %s8
  %s10 = sld [smem:[#allocation0]]
  $region46: #{rnn_forward.1} parent=0
    _
  %s12 = ssub.s32 1, %s10
  %s13 = scalar_select 0, %s12, %s10
  %v14 = vstv %s6
  %15 = vst [vmem:[#allocation2] sm:$0x1] %v14
  $region1: #{rnn_forward.1} parent=0
    #allocation3 [shape = 'u8[1024]{0}', space=vmem, size = 0x400, scoped, tag = 'output window, operand 0, single buffered']
    #allocation4 [shape = 's32[1]{0}', space=sflag, size = 0x4, scoped, tag = 'scoped memory for rnn_forward.1']
    #allocation5 [shape = 'u8[1024]{0}', space=vmem, size = 0x400, scoped, tag = 'output window, operand 1, single buffered']
    #allocation6 [shape = 's32[1]{0}', space=sflag, size = 0x4, scoped, tag = 'scoped memory for rnn_forward.1']
    %16 = vsyncpa [#allocation4], 0
    %17 = vsyncpa [#allocation6], 0
    // Predicated region
    $region2: #{rnn_forward.1} parent=1 // pred_check
      _
    $region3: #{rnn_forward.1} parent=1 // pred_check_branch
      %19 = sbr.rel (0) target = $region5
    $region4: #{rnn_forward.1} parent=1 // pred_region
      _
    $region5: #{rnn_forward.1} parent=1 // pred_fallthru
      _
    // Predicated region
    $region6: #{rnn_forward.1} parent=1 // pred_check
      _
    $region7: #{rnn_forward.1} parent=1 // pred_check_branch
      %21 = sbr.rel (0) target = $region9
    $region8: #{rnn_forward.1} parent=1 // pred_region
      _
    $region9: #{rnn_forward.1} parent=1 // pred_fallthru
      _
    // Predicated region
    $region10: #{rnn_forward.1} parent=1 // pred_check
      _
    $region11: #{rnn_forward.1} parent=1 // pred_check_branch
      %23 = sbr.rel (0) target = $region13
    $region12: #{rnn_forward.1} parent=1 // pred_region
      _
    $region13: #{rnn_forward.1} parent=1 // pred_fallthru
      _
    // Predicated region
    $region14: #{rnn_forward.1} parent=1 // pred_check
      _
    $region15: #{rnn_forward.1} parent=1 // pred_check_branch
      %25 = sbr.rel (0) target = $region17
    $region16: #{rnn_forward.1} parent=1 // pred_region
      _
    $region17: #{rnn_forward.1} parent=1 // pred_fallthru
      _
    // Predicated region
    $region18: #{rnn_forward.1} parent=1 // pred_check
      _
    $region19: #{rnn_forward.1} parent=1 // pred_check_branch
      %27 = sbr.rel (0) target = $region21
    $region20: #{rnn_forward.1} parent=1 // pred_region
      _
    $region21: #{rnn_forward.1} parent=1 // pred_fallthru
      _
    // Predicated region
    $region22: #{rnn_forward.1} parent=1 // pred_check
      _
    $region23: #{rnn_forward.1} parent=1 // pred_check_branch
      %29 = sbr.rel (0) target = $region25
    $region24: #{rnn_forward.1} parent=1 // pred_region
      _
    $region25: #{rnn_forward.1} parent=1 // pred_fallthru
      _
    // Predicated region
    $region26: #{rnn_forward.1} parent=1 // pred_check
      _
    $region27: #{rnn_forward.1} parent=1 // pred_check_branch
      %31 = sbr.rel (0) target = $region29
    $region28: #{rnn_forward.1} parent=1 // pred_region
      _
    $region29: #{rnn_forward.1} parent=1 // pred_fallthru
      _
    %v32 = vld [vmem:[%s0] sm:$0x3]
    %v33 = vld [vmem:[%s2] sm:$0x1]
    %v34 = vld [vmem:[%s3] sm:$0xff]
    %v35 = vld [vmem:[%s3 + $0x8] sm:$0xff]
    %v36 = vld [vmem:[%s3 + $0x10] sm:$0xff]
    %v37 = vld [vmem:[%s3 + $0x18] sm:$0xff]
    %v38 = vld [vmem:[%s4] sm:$0x1]
    %v39 = vld [vmem:[%s5] sm:$0x1]
    %v40 = vlaneseq
    %v41 = vand.u32 %v40, 127
    %v42 = vld [vmem:[%s1] sm:$0x3]
    %vm43 = vcmask 261120
    %v45 = vsel %vm43, %v42, 0
    %47 = vmatpush.msra.mxu0 0.0
    %48 = vmatpush.msra.mxu0 0.0
    %49 = vmatpush.msra.mxu0 0.0
    %50 = vmatpush.msra.mxu0 0.0
    %51 = vmatpush.msra.mxu0 0.0
    %52 = vmatpush.msra.mxu0 0.0
    %53 = vmatpush.msra.mxu0 0.0
    %54 = vmatpush.msra.mxu0 0.0
    %55 = vmatpush.msra.mxu0 0.0
    %56 = vmatpush.msra.mxu0 0.0
    %57 = vmatpush.msra.mxu0 0.0
    %58 = vmatpush.msra.mxu0 0.0
    %v59 = vand.u32 %v37, 4294901760
    %60 = vmatpush.msra.mxu0 %v59
    %v61 = vand.u32 %v36, 4294901760
    %62 = vmatpush.msra.mxu0 %v61
    %v63 = vand.u32 %v35, 4294901760
    %64 = vmatpush.msra.mxu0 %v63
    %v65 = vand.u32 %v34, 4294901760
    %66 = vmatpush.msra.mxu0 %v65
    %v67 = vand.u32 %v45, 4294901760
    %v68 = vsub.f32 %v45, %v67
    %v69 = vand.u32 %v68, 4294901760
    %v70 = vsub.f32 %v68, %v69
    %v71 = vand.u32 %v70, 4294901760
    %72 = vmatmul.f32.gmra.mxu0 %v71
    %v73 = vpop.f32.mrf.mxu0
    %v74 = vadd.f32 0.0, %v73
    %75 = vdwg.mxu0
    %76 = vmatpush.msra.mxu0 0.0
    %77 = vmatpush.msra.mxu0 0.0
    %78 = vmatpush.msra.mxu0 0.0
    %79 = vmatpush.msra.mxu0 0.0
    %80 = vmatpush.msra.mxu0 0.0
    %81 = vmatpush.msra.mxu0 0.0
    %82 = vmatpush.msra.mxu0 0.0
    %83 = vmatpush.msra.mxu0 0.0
    %84 = vmatpush.msra.mxu0 0.0
    %85 = vmatpush.msra.mxu0 0.0
    %86 = vmatpush.msra.mxu0 0.0
    %87 = vmatpush.msra.mxu0 0.0
    %v88 = vand.u32 %v37, 4294901760
    %v89 = vsub.f32 %v37, %v88
    %v90 = vand.u32 %v89, 4294901760
    %v91 = vsub.f32 %v89, %v90
    %v92 = vand.u32 %v91, 4294901760
    %93 = vmatpush.msra.mxu0 %v92
    %v94 = vand.u32 %v36, 4294901760
    %v95 = vsub.f32 %v36, %v94
    %v96 = vand.u32 %v95, 4294901760
    %v97 = vsub.f32 %v95, %v96
    %v98 = vand.u32 %v97, 4294901760
    %99 = vmatpush.msra.mxu0 %v98
    %v100 = vand.u32 %v35, 4294901760
    %v101 = vsub.f32 %v35, %v100
    %v102 = vand.u32 %v101, 4294901760
    %v103 = vsub.f32 %v101, %v102
    %v104 = vand.u32 %v103, 4294901760
    %105 = vmatpush.msra.mxu0 %v104
    %v106 = vand.u32 %v34, 4294901760
    %v107 = vsub.f32 %v34, %v106
    %v108 = vand.u32 %v107, 4294901760
    %v109 = vsub.f32 %v107, %v108
    %v110 = vand.u32 %v109, 4294901760
    %111 = vmatpush.msra.mxu0 %v110
    %v112 = vand.u32 %v45, 4294901760
    %113 = vmatmul.f32.gmra.mxu0 %v112
    %v114 = vpop.f32.mrf.mxu0
    %v115 = vadd.f32 %v74, %v114
    %116 = vdwg.mxu0
    %117 = vmatpush.msra.mxu0 0.0
    %118 = vmatpush.msra.mxu0 0.0
    %119 = vmatpush.msra.mxu0 0.0
    %120 = vmatpush.msra.mxu0 0.0
    %121 = vmatpush.msra.mxu0 0.0
    %122 = vmatpush.msra.mxu0 0.0
    %123 = vmatpush.msra.mxu0 0.0
    %124 = vmatpush.msra.mxu0 0.0
    %125 = vmatpush.msra.mxu0 0.0
    %126 = vmatpush.msra.mxu0 0.0
    %127 = vmatpush.msra.mxu0 0.0
    %128 = vmatpush.msra.mxu0 0.0
    %v129 = vand.u32 %v37, 4294901760
    %v130 = vsub.f32 %v37, %v129
    %131 = vmatpush.msra.mxu0 %v130
    %v132 = vand.u32 %v36, 4294901760
    %v133 = vsub.f32 %v36, %v132
    %134 = vmatpush.msra.mxu0 %v133
    %v135 = vand.u32 %v35, 4294901760
    %v136 = vsub.f32 %v35, %v135
    %137 = vmatpush.msra.mxu0 %v136
    %v138 = vand.u32 %v34, 4294901760
    %v139 = vsub.f32 %v34, %v138
    %140 = vmatpush.msra.mxu0 %v139
    %v141 = vand.u32 %v45, 4294901760
    %v142 = vsub.f32 %v45, %v141
    %143 = vmatmul.f32.gmra.mxu0 %v142
    %v144 = vpop.f32.mrf.mxu0
    %v145 = vadd.f32 %v115, %v144
    %146 = vdwg.mxu0
    %147 = vmatpush.msra.mxu0 0.0
    %148 = vmatpush.msra.mxu0 0.0
    %149 = vmatpush.msra.mxu0 0.0
    %150 = vmatpush.msra.mxu0 0.0
    %151 = vmatpush.msra.mxu0 0.0
    %152 = vmatpush.msra.mxu0 0.0
    %153 = vmatpush.msra.mxu0 0.0
    %154 = vmatpush.msra.mxu0 0.0
    %155 = vmatpush.msra.mxu0 0.0
    %156 = vmatpush.msra.mxu0 0.0
    %157 = vmatpush.msra.mxu0 0.0
    %158 = vmatpush.msra.mxu0 0.0
    %v159 = vand.u32 %v37, 4294901760
    %160 = vmatpush.msra.mxu0 %v159
    %v161 = vand.u32 %v36, 4294901760
    %162 = vmatpush.msra.mxu0 %v161
    %v163 = vand.u32 %v35, 4294901760
    %164 = vmatpush.msra.mxu0 %v163
    %v165 = vand.u32 %v34, 4294901760
    %166 = vmatpush.msra.mxu0 %v165
    %v167 = vand.u32 %v45, 4294901760
    %v168 = vsub.f32 %v45, %v167
    %v169 = vand.u32 %v168, 4294901760
    %170 = vmatmul.f32.gmra.mxu0 %v169
    %v171 = vpop.f32.mrf.mxu0
    %v172 = vadd.f32 %v145, %v171
    %173 = vdwg.mxu0
    %174 = vmatpush.msra.mxu0 0.0
    %175 = vmatpush.msra.mxu0 0.0
    %176 = vmatpush.msra.mxu0 0.0
    %177 = vmatpush.msra.mxu0 0.0
    %178 = vmatpush.msra.mxu0 0.0
    %179 = vmatpush.msra.mxu0 0.0
    %180 = vmatpush.msra.mxu0 0.0
    %181 = vmatpush.msra.mxu0 0.0
    %182 = vmatpush.msra.mxu0 0.0
    %183 = vmatpush.msra.mxu0 0.0
    %184 = vmatpush.msra.mxu0 0.0
    %185 = vmatpush.msra.mxu0 0.0
    %v186 = vand.u32 %v37, 4294901760
    %v187 = vsub.f32 %v37, %v186
    %v188 = vand.u32 %v187, 4294901760
    %189 = vmatpush.msra.mxu0 %v188
    %v190 = vand.u32 %v36, 4294901760
    %v191 = vsub.f32 %v36, %v190
    %v192 = vand.u32 %v191, 4294901760
    %193 = vmatpush.msra.mxu0 %v192
    %v194 = vand.u32 %v35, 4294901760
    %v195 = vsub.f32 %v35, %v194
    %v196 = vand.u32 %v195, 4294901760
    %197 = vmatpush.msra.mxu0 %v196
    %v198 = vand.u32 %v34, 4294901760
    %v199 = vsub.f32 %v34, %v198
    %v200 = vand.u32 %v199, 4294901760
    %201 = vmatpush.msra.mxu0 %v200
    %v202 = vand.u32 %v45, 4294901760
    %203 = vmatmul.f32.gmra.mxu0 %v202
    %v204 = vpop.f32.mrf.mxu0
    %v205 = vadd.f32 %v172, %v204
    %206 = vdwg.mxu0
    %207 = vmatpush.msra.mxu0 0.0
    %208 = vmatpush.msra.mxu0 0.0
    %209 = vmatpush.msra.mxu0 0.0
    %210 = vmatpush.msra.mxu0 0.0
    %211 = vmatpush.msra.mxu0 0.0
    %212 = vmatpush.msra.mxu0 0.0
    %213 = vmatpush.msra.mxu0 0.0
    %214 = vmatpush.msra.mxu0 0.0
    %215 = vmatpush.msra.mxu0 0.0
    %216 = vmatpush.msra.mxu0 0.0
    %217 = vmatpush.msra.mxu0 0.0
    %218 = vmatpush.msra.mxu0 0.0
    %v219 = vand.u32 %v37, 4294901760
    %220 = vmatpush.msra.mxu0 %v219
    %v221 = vand.u32 %v36, 4294901760
    %222 = vmatpush.msra.mxu0 %v221
    %v223 = vand.u32 %v35, 4294901760
    %224 = vmatpush.msra.mxu0 %v223
    %v225 = vand.u32 %v34, 4294901760
    %226 = vmatpush.msra.mxu0 %v225
    %v227 = vand.u32 %v45, 4294901760
    %228 = vmatmul.f32.gmra.mxu0 %v227
    %v229 = vpop.f32.mrf.mxu0
    %v230 = vadd.f32 %v205, %v229
    %231 = vdwg.mxu0
    %233 = vset.pattern.permute.xlu0 0
    %234 = vperm.xlu0 %233, %v32
    %v235 = vpop.permute.xlu0 %234
    %v238 = vperm.slane %v33, 0
    %v240 = vmul.f32 %v235, %v238
    %v242 = vperm.slane %v38, 0
    %v244 = vadd.f32 %v240, %v242
    %v245 = vadd.f32 %v244, %v230
    %v246 = vtanh.pop %v245
    %v248 = vperm.slane %v39, 0
    %v250 = vmul.f32 %v246, %v248
    %vm251 = vcmask 254976
    %v252 = vsel %vm251, %v250, 0.0
    %253 = vadd.xlane.f32.xlu0 %v252
    %v254 = vpop.xlane.xlu0 %253
    %vm255 = vcmp.eq.s32.totalorder %v41, 0
    %v256 = vsel %vm255, %v254, 0.0
    %v257 = vadd.f32 %v256, 0.0
    %v259 = vsel %vm43, %v246, 0
    %261 = vmatpush.msra.mxu0 0.0
    %262 = vmatpush.msra.mxu0 0.0
    %263 = vmatpush.msra.mxu0 0.0
    %264 = vmatpush.msra.mxu0 0.0
    %265 = vmatpush.msra.mxu0 0.0
    %266 = vmatpush.msra.mxu0 0.0
    %267 = vmatpush.msra.mxu0 0.0
    %268 = vmatpush.msra.mxu0 0.0
    %269 = vmatpush.msra.mxu0 0.0
    %270 = vmatpush.msra.mxu0 0.0
    %271 = vmatpush.msra.mxu0 0.0
    %272 = vmatpush.msra.mxu0 0.0
    %v273 = vand.u32 %v37, 4294901760
    %274 = vmatpush.msra.mxu0 %v273
    %v275 = vand.u32 %v36, 4294901760
    %276 = vmatpush.msra.mxu0 %v275
    %v277 = vand.u32 %v35, 4294901760
    %278 = vmatpush.msra.mxu0 %v277
    %v279 = vand.u32 %v34, 4294901760
    %280 = vmatpush.msra.mxu0 %v279
    %v281 = vand.u32 %v259, 4294901760
    %v282 = vsub.f32 %v259, %v281
    %v283 = vand.u32 %v282, 4294901760
    %v284 = vsub.f32 %v282, %v283
    %v285 = vand.u32 %v284, 4294901760
    %286 = vmatmul.f32.gmra.mxu0 %v285
    %v287 = vpop.f32.mrf.mxu0
    %v288 = vadd.f32 0.0, %v287
    %289 = vdwg.mxu0
    %290 = vmatpush.msra.mxu0 0.0
    %291 = vmatpush.msra.mxu0 0.0
    %292 = vmatpush.msra.mxu0 0.0
    %293 = vmatpush.msra.mxu0 0.0
    %294 = vmatpush.msra.mxu0 0.0
    %295 = vmatpush.msra.mxu0 0.0
    %296 = vmatpush.msra.mxu0 0.0
    %297 = vmatpush.msra.mxu0 0.0
    %298 = vmatpush.msra.mxu0 0.0
    %299 = vmatpush.msra.mxu0 0.0
    %300 = vmatpush.msra.mxu0 0.0
    %301 = vmatpush.msra.mxu0 0.0
    %v302 = vand.u32 %v37, 4294901760
    %v303 = vsub.f32 %v37, %v302
    %v304 = vand.u32 %v303, 4294901760
    %v305 = vsub.f32 %v303, %v304
    %v306 = vand.u32 %v305, 4294901760
    %307 = vmatpush.msra.mxu0 %v306
    %v308 = vand.u32 %v36, 4294901760
    %v309 = vsub.f32 %v36, %v308
    %v310 = vand.u32 %v309, 4294901760
    %v311 = vsub.f32 %v309, %v310
    %v312 = vand.u32 %v311, 4294901760
    %313 = vmatpush.msra.mxu0 %v312
    %v314 = vand.u32 %v35, 4294901760
    %v315 = vsub.f32 %v35, %v314
    %v316 = vand.u32 %v315, 4294901760
    %v317 = vsub.f32 %v315, %v316
    %v318 = vand.u32 %v317, 4294901760
    %319 = vmatpush.msra.mxu0 %v318
    %v320 = vand.u32 %v34, 4294901760
    %v321 = vsub.f32 %v34, %v320
    %v322 = vand.u32 %v321, 4294901760
    %v323 = vsub.f32 %v321, %v322
    %v324 = vand.u32 %v323, 4294901760
    %325 = vmatpush.msra.mxu0 %v324
    %v326 = vand.u32 %v259, 4294901760
    %327 = vmatmul.f32.gmra.mxu0 %v326
    %v328 = vpop.f32.mrf.mxu0
    %v329 = vadd.f32 %v288, %v328
    %330 = vdwg.mxu0
    %331 = vmatpush.msra.mxu0 0.0
    %332 = vmatpush.msra.mxu0 0.0
    %333 = vmatpush.msra.mxu0 0.0
    %334 = vmatpush.msra.mxu0 0.0
    %335 = vmatpush.msra.mxu0 0.0
    %336 = vmatpush.msra.mxu0 0.0
    %337 = vmatpush.msra.mxu0 0.0
    %338 = vmatpush.msra.mxu0 0.0
    %339 = vmatpush.msra.mxu0 0.0
    %340 = vmatpush.msra.mxu0 0.0
    %341 = vmatpush.msra.mxu0 0.0
    %342 = vmatpush.msra.mxu0 0.0
    %v343 = vand.u32 %v37, 4294901760
    %v344 = vsub.f32 %v37, %v343
    %345 = vmatpush.msra.mxu0 %v344
    %v346 = vand.u32 %v36, 4294901760
    %v347 = vsub.f32 %v36, %v346
    %348 = vmatpush.msra.mxu0 %v347
    %v349 = vand.u32 %v35, 4294901760
    %v350 = vsub.f32 %v35, %v349
    %351 = vmatpush.msra.mxu0 %v350
    %v352 = vand.u32 %v34, 4294901760
    %v353 = vsub.f32 %v34, %v352
    %354 = vmatpush.msra.mxu0 %v353
    %v355 = vand.u32 %v259, 4294901760
    %v356 = vsub.f32 %v259, %v355
    %357 = vmatmul.f32.gmra.mxu0 %v356
    %v358 = vpop.f32.mrf.mxu0
    %v359 = vadd.f32 %v329, %v358
    %360 = vdwg.mxu0
    %361 = vmatpush.msra.mxu0 0.0
    %362 = vmatpush.msra.mxu0 0.0
    %363 = vmatpush.msra.mxu0 0.0
    %364 = vmatpush.msra.mxu0 0.0
    %365 = vmatpush.msra.mxu0 0.0
    %366 = vmatpush.msra.mxu0 0.0
    %367 = vmatpush.msra.mxu0 0.0
    %368 = vmatpush.msra.mxu0 0.0
    %369 = vmatpush.msra.mxu0 0.0
    %370 = vmatpush.msra.mxu0 0.0
    %371 = vmatpush.msra.mxu0 0.0
    %372 = vmatpush.msra.mxu0 0.0
    %v373 = vand.u32 %v37, 4294901760
    %374 = vmatpush.msra.mxu0 %v373
    %v375 = vand.u32 %v36, 4294901760
    %376 = vmatpush.msra.mxu0 %v375
    %v377 = vand.u32 %v35, 4294901760
    %378 = vmatpush.msra.mxu0 %v377
    %v379 = vand.u32 %v34, 4294901760
    %380 = vmatpush.msra.mxu0 %v379
    %v381 = vand.u32 %v259, 4294901760
    %v382 = vsub.f32 %v259, %v381
    %v383 = vand.u32 %v382, 4294901760
    %384 = vmatmul.f32.gmra.mxu0 %v383
    %v385 = vpop.f32.mrf.mxu0
    %v386 = vadd.f32 %v359, %v385
    %387 = vdwg.mxu0
    %388 = vmatpush.msra.mxu0 0.0
    %389 = vmatpush.msra.mxu0 0.0
    %390 = vmatpush.msra.mxu0 0.0
    %391 = vmatpush.msra.mxu0 0.0
    %392 = vmatpush.msra.mxu0 0.0
    %393 = vmatpush.msra.mxu0 0.0
    %394 = vmatpush.msra.mxu0 0.0
    %395 = vmatpush.msra.mxu0 0.0
    %396 = vmatpush.msra.mxu0 0.0
    %397 = vmatpush.msra.mxu0 0.0
    %398 = vmatpush.msra.mxu0 0.0
    %399 = vmatpush.msra.mxu0 0.0
    %v400 = vand.u32 %v37, 4294901760
    %v401 = vsub.f32 %v37, %v400
    %v402 = vand.u32 %v401, 4294901760
    %403 = vmatpush.msra.mxu0 %v402
    %v404 = vand.u32 %v36, 4294901760
    %v405 = vsub.f32 %v36, %v404
    %v406 = vand.u32 %v405, 4294901760
    %407 = vmatpush.msra.mxu0 %v406
    %v408 = vand.u32 %v35, 4294901760
    %v409 = vsub.f32 %v35, %v408
    %v410 = vand.u32 %v409, 4294901760
    %411 = vmatpush.msra.mxu0 %v410
    %v412 = vand.u32 %v34, 4294901760
    %v413 = vsub.f32 %v34, %v412
    %v414 = vand.u32 %v413, 4294901760
    %415 = vmatpush.msra.mxu0 %v414
    %v416 = vand.u32 %v259, 4294901760
    %417 = vmatmul.f32.gmra.mxu0 %v416
    %v418 = vpop.f32.mrf.mxu0
    %v419 = vadd.f32 %v386, %v418
    %420 = vdwg.mxu0
    %421 = vmatpush.msra.mxu0 0.0
    %422 = vmatpush.msra.mxu0 0.0
    %423 = vmatpush.msra.mxu0 0.0
    %424 = vmatpush.msra.mxu0 0.0
    %425 = vmatpush.msra.mxu0 0.0
    %426 = vmatpush.msra.mxu0 0.0
    %427 = vmatpush.msra.mxu0 0.0
    %428 = vmatpush.msra.mxu0 0.0
    %429 = vmatpush.msra.mxu0 0.0
    %430 = vmatpush.msra.mxu0 0.0
    %431 = vmatpush.msra.mxu0 0.0
    %432 = vmatpush.msra.mxu0 0.0
    %v433 = vand.u32 %v37, 4294901760
    %434 = vmatpush.msra.mxu0 %v433
    %v435 = vand.u32 %v36, 4294901760
    %436 = vmatpush.msra.mxu0 %v435
    %v437 = vand.u32 %v35, 4294901760
    %438 = vmatpush.msra.mxu0 %v437
    %v439 = vand.u32 %v34, 4294901760
    %440 = vmatpush.msra.mxu0 %v439
    %v441 = vand.u32 %v259, 4294901760
    %442 = vmatmul.f32.gmra.mxu0 %v441
    %v443 = vpop.f32.mrf.mxu0
    %v444 = vadd.f32 %v419, %v443
    %445 = vdwg.mxu0
    %446 = vset.pattern.permute.xlu0 1
    %447 = vperm.xlu0 %446, %v32
    %v448 = vpop.permute.xlu0 %447
    %v450 = vmul.f32 %v448, %v238
    %v451 = vadd.f32 %v450, %v242
    %v452 = vadd.f32 %v451, %v444
    %v453 = vtanh.pop %v452
    %v454 = vmul.f32 %v453, %v248
    %v455 = vsel %vm251, %v454, 0.0
    %456 = vadd.xlane.f32.xlu0 %v455
    %v457 = vpop.xlane.xlu0 %456
    %vm458 = vcmp.eq.s32.totalorder %v41, 1
    %v459 = vsel %vm458, %v457, 0.0
    %v460 = vadd.f32 %v257, %v459
    %v462 = vsel %vm43, %v453, 0
    %464 = vmatpush.msra.mxu0 0.0
    %465 = vmatpush.msra.mxu0 0.0
    %466 = vmatpush.msra.mxu0 0.0
    %467 = vmatpush.msra.mxu0 0.0
    %468 = vmatpush.msra.mxu0 0.0
    %469 = vmatpush.msra.mxu0 0.0
    %470 = vmatpush.msra.mxu0 0.0
    %471 = vmatpush.msra.mxu0 0.0
    %472 = vmatpush.msra.mxu0 0.0
    %473 = vmatpush.msra.mxu0 0.0
    %474 = vmatpush.msra.mxu0 0.0
    %475 = vmatpush.msra.mxu0 0.0
    %v476 = vand.u32 %v37, 4294901760
    %477 = vmatpush.msra.mxu0 %v476
    %v478 = vand.u32 %v36, 4294901760
    %479 = vmatpush.msra.mxu0 %v478
    %v480 = vand.u32 %v35, 4294901760
    %481 = vmatpush.msra.mxu0 %v480
    %v482 = vand.u32 %v34, 4294901760
    %483 = vmatpush.msra.mxu0 %v482
    %v484 = vand.u32 %v462, 4294901760
    %v485 = vsub.f32 %v462, %v484
    %v486 = vand.u32 %v485, 4294901760
    %v487 = vsub.f32 %v485, %v486
    %v488 = vand.u32 %v487, 4294901760
    %489 = vmatmul.f32.gmra.mxu0 %v488
    %v490 = vpop.f32.mrf.mxu0
    %v491 = vadd.f32 0.0, %v490
    %492 = vdwg.mxu0
    %493 = vmatpush.msra.mxu0 0.0
    %494 = vmatpush.msra.mxu0 0.0
    %495 = vmatpush.msra.mxu0 0.0
    %496 = vmatpush.msra.mxu0 0.0
    %497 = vmatpush.msra.mxu0 0.0
    %498 = vmatpush.msra.mxu0 0.0
    %499 = vmatpush.msra.mxu0 0.0
    %500 = vmatpush.msra.mxu0 0.0
    %501 = vmatpush.msra.mxu0 0.0
    %502 = vmatpush.msra.mxu0 0.0
    %503 = vmatpush.msra.mxu0 0.0
    %504 = vmatpush.msra.mxu0 0.0
    %v505 = vand.u32 %v37, 4294901760
    %v506 = vsub.f32 %v37, %v505
    %v507 = vand.u32 %v506, 4294901760
    %v508 = vsub.f32 %v506, %v507
    %v509 = vand.u32 %v508, 4294901760
    %510 = vmatpush.msra.mxu0 %v509
    %v511 = vand.u32 %v36, 4294901760
    %v512 = vsub.f32 %v36, %v511
    %v513 = vand.u32 %v512, 4294901760
    %v514 = vsub.f32 %v512, %v513
    %v515 = vand.u32 %v514, 4294901760
    %516 = vmatpush.msra.mxu0 %v515
    %v517 = vand.u32 %v35, 4294901760
    %v518 = vsub.f32 %v35, %v517
    %v519 = vand.u32 %v518, 4294901760
    %v520 = vsub.f32 %v518, %v519
    %v521 = vand.u32 %v520, 4294901760
    %522 = vmatpush.msra.mxu0 %v521
    %v523 = vand.u32 %v34, 4294901760
    %v524 = vsub.f32 %v34, %v523
    %v525 = vand.u32 %v524, 4294901760
    %v526 = vsub.f32 %v524, %v525
    %v527 = vand.u32 %v526, 4294901760
    %528 = vmatpush.msra.mxu0 %v527
    %v529 = vand.u32 %v462, 4294901760
    %530 = vmatmul.f32.gmra.mxu0 %v529
    %v531 = vpop.f32.mrf.mxu0
    %v532 = vadd.f32 %v491, %v531
    %533 = vdwg.mxu0
    %534 = vmatpush.msra.mxu0 0.0
    %535 = vmatpush.msra.mxu0 0.0
    %536 = vmatpush.msra.mxu0 0.0
    %537 = vmatpush.msra.mxu0 0.0
    %538 = vmatpush.msra.mxu0 0.0
    %539 = vmatpush.msra.mxu0 0.0
    %540 = vmatpush.msra.mxu0 0.0
    %541 = vmatpush.msra.mxu0 0.0
    %542 = vmatpush.msra.mxu0 0.0
    %543 = vmatpush.msra.mxu0 0.0
    %544 = vmatpush.msra.mxu0 0.0
    %545 = vmatpush.msra.mxu0 0.0
    %v546 = vand.u32 %v37, 4294901760
    %v547 = vsub.f32 %v37, %v546
    %548 = vmatpush.msra.mxu0 %v547
    %v549 = vand.u32 %v36, 4294901760
    %v550 = vsub.f32 %v36, %v549
    %551 = vmatpush.msra.mxu0 %v550
    %v552 = vand.u32 %v35, 4294901760
    %v553 = vsub.f32 %v35, %v552
    %554 = vmatpush.msra.mxu0 %v553
    %v555 = vand.u32 %v34, 4294901760
    %v556 = vsub.f32 %v34, %v555
    %557 = vmatpush.msra.mxu0 %v556
    %v558 = vand.u32 %v462, 4294901760
    %v559 = vsub.f32 %v462, %v558
    %560 = vmatmul.f32.gmra.mxu0 %v559
    %v561 = vpop.f32.mrf.mxu0
    %v562 = vadd.f32 %v532, %v561
    %563 = vdwg.mxu0
    %564 = vmatpush.msra.mxu0 0.0
    %565 = vmatpush.msra.mxu0 0.0
    %566 = vmatpush.msra.mxu0 0.0
    %567 = vmatpush.msra.mxu0 0.0
    %568 = vmatpush.msra.mxu0 0.0
    %569 = vmatpush.msra.mxu0 0.0
    %570 = vmatpush.msra.mxu0 0.0
    %571 = vmatpush.msra.mxu0 0.0
    %572 = vmatpush.msra.mxu0 0.0
    %573 = vmatpush.msra.mxu0 0.0
    %574 = vmatpush.msra.mxu0 0.0
    %575 = vmatpush.msra.mxu0 0.0
    %v576 = vand.u32 %v37, 4294901760
    %577 = vmatpush.msra.mxu0 %v576
    %v578 = vand.u32 %v36, 4294901760
    %579 = vmatpush.msra.mxu0 %v578
    %v580 = vand.u32 %v35, 4294901760
    %581 = vmatpush.msra.mxu0 %v580
    %v582 = vand.u32 %v34, 4294901760
    %583 = vmatpush.msra.mxu0 %v582
    %v584 = vand.u32 %v462, 4294901760
    %v585 = vsub.f32 %v462, %v584
    %v586 = vand.u32 %v585, 4294901760
    %587 = vmatmul.f32.gmra.mxu0 %v586
    %v588 = vpop.f32.mrf.mxu0
    %v589 = vadd.f32 %v562, %v588
    %590 = vdwg.mxu0
    %591 = vmatpush.msra.mxu0 0.0
    %592 = vmatpush.msra.mxu0 0.0
    %593 = vmatpush.msra.mxu0 0.0
    %594 = vmatpush.msra.mxu0 0.0
    %595 = vmatpush.msra.mxu0 0.0
    %596 = vmatpush.msra.mxu0 0.0
    %597 = vmatpush.msra.mxu0 0.0
    %598 = vmatpush.msra.mxu0 0.0
    %599 = vmatpush.msra.mxu0 0.0
    %600 = vmatpush.msra.mxu0 0.0
    %601 = vmatpush.msra.mxu0 0.0
    %602 = vmatpush.msra.mxu0 0.0
    %v603 = vand.u32 %v37, 4294901760
    %v604 = vsub.f32 %v37, %v603
    %v605 = vand.u32 %v604, 4294901760
    %606 = vmatpush.msra.mxu0 %v605
    %v607 = vand.u32 %v36, 4294901760
    %v608 = vsub.f32 %v36, %v607
    %v609 = vand.u32 %v608, 4294901760
    %610 = vmatpush.msra.mxu0 %v609
    %v611 = vand.u32 %v35, 4294901760
    %v612 = vsub.f32 %v35, %v611
    %v613 = vand.u32 %v612, 4294901760
    %614 = vmatpush.msra.mxu0 %v613
    %v615 = vand.u32 %v34, 4294901760
    %v616 = vsub.f32 %v34, %v615
    %v617 = vand.u32 %v616, 4294901760
    %618 = vmatpush.msra.mxu0 %v617
    %v619 = vand.u32 %v462, 4294901760
    %620 = vmatmul.f32.gmra.mxu0 %v619
    %v621 = vpop.f32.mrf.mxu0
    %v622 = vadd.f32 %v589, %v621
    %623 = vdwg.mxu0
    %624 = vmatpush.msra.mxu0 0.0
    %625 = vmatpush.msra.mxu0 0.0
    %626 = vmatpush.msra.mxu0 0.0
    %627 = vmatpush.msra.mxu0 0.0
    %628 = vmatpush.msra.mxu0 0.0
    %629 = vmatpush.msra.mxu0 0.0
    %630 = vmatpush.msra.mxu0 0.0
    %631 = vmatpush.msra.mxu0 0.0
    %632 = vmatpush.msra.mxu0 0.0
    %633 = vmatpush.msra.mxu0 0.0
    %634 = vmatpush.msra.mxu0 0.0
    %635 = vmatpush.msra.mxu0 0.0
    %v636 = vand.u32 %v37, 4294901760
    %637 = vmatpush.msra.mxu0 %v636
    %v638 = vand.u32 %v36, 4294901760
    %639 = vmatpush.msra.mxu0 %v638
    %v640 = vand.u32 %v35, 4294901760
    %641 = vmatpush.msra.mxu0 %v640
    %v642 = vand.u32 %v34, 4294901760
    %643 = vmatpush.msra.mxu0 %v642
    %v644 = vand.u32 %v462, 4294901760
    %645 = vmatmul.f32.gmra.mxu0 %v644
    %v646 = vpop.f32.mrf.mxu0
    %v647 = vadd.f32 %v622, %v646
    %648 = vdwg.mxu0
    %649 = vset.pattern.permute.xlu0 2
    %650 = vperm.xlu0 %649, %v32
    %v651 = vpop.permute.xlu0 %650
    %v653 = vmul.f32 %v651, %v238
    %v654 = vadd.f32 %v653, %v242
    %v655 = vadd.f32 %v654, %v647
    %v656 = vtanh.pop %v655
    %v657 = vmul.f32 %v656, %v248
    %v658 = vsel %vm251, %v657, 0.0
    %659 = vadd.xlane.f32.xlu0 %v658
    %v660 = vpop.xlane.xlu0 %659
    %vm661 = vcmp.eq.s32.totalorder %v41, 2
    %v662 = vsel %vm661, %v660, 0.0
    %v663 = vadd.f32 %v460, %v662
    %v665 = vsel %vm43, %v656, 0
    %667 = vmatpush.msra.mxu0 0.0
    %668 = vmatpush.msra.mxu0 0.0
    %669 = vmatpush.msra.mxu0 0.0
    %670 = vmatpush.msra.mxu0 0.0
    %671 = vmatpush.msra.mxu0 0.0
    %672 = vmatpush.msra.mxu0 0.0
    %673 = vmatpush.msra.mxu0 0.0
    %674 = vmatpush.msra.mxu0 0.0
    %675 = vmatpush.msra.mxu0 0.0
    %676 = vmatpush.msra.mxu0 0.0
    %677 = vmatpush.msra.mxu0 0.0
    %678 = vmatpush.msra.mxu0 0.0
    %v679 = vand.u32 %v37, 4294901760
    %680 = vmatpush.msra.mxu0 %v679
    %v681 = vand.u32 %v36, 4294901760
    %682 = vmatpush.msra.mxu0 %v681
    %v683 = vand.u32 %v35, 4294901760
    %684 = vmatpush.msra.mxu0 %v683
    %v685 = vand.u32 %v34, 4294901760
    %686 = vmatpush.msra.mxu0 %v685
    %v687 = vand.u32 %v665, 4294901760
    %v688 = vsub.f32 %v665, %v687
    %v689 = vand.u32 %v688, 4294901760
    %v690 = vsub.f32 %v688, %v689
    %v691 = vand.u32 %v690, 4294901760
    %692 = vmatmul.f32.gmra.mxu0 %v691
    %v693 = vpop.f32.mrf.mxu0
    %v694 = vadd.f32 0.0, %v693
    %695 = vdwg.mxu0
    %696 = vmatpush.msra.mxu0 0.0
    %697 = vmatpush.msra.mxu0 0.0
    %698 = vmatpush.msra.mxu0 0.0
    %699 = vmatpush.msra.mxu0 0.0
    %700 = vmatpush.msra.mxu0 0.0
    %701 = vmatpush.msra.mxu0 0.0
    %702 = vmatpush.msra.mxu0 0.0
    %703 = vmatpush.msra.mxu0 0.0
    %704 = vmatpush.msra.mxu0 0.0
    %705 = vmatpush.msra.mxu0 0.0
    %706 = vmatpush.msra.mxu0 0.0
    %707 = vmatpush.msra.mxu0 0.0
    %v708 = vand.u32 %v37, 4294901760
    %v709 = vsub.f32 %v37, %v708
    %v710 = vand.u32 %v709, 4294901760
    %v711 = vsub.f32 %v709, %v710
    %v712 = vand.u32 %v711, 4294901760
    %713 = vmatpush.msra.mxu0 %v712
    %v714 = vand.u32 %v36, 4294901760
    %v715 = vsub.f32 %v36, %v714
    %v716 = vand.u32 %v715, 4294901760
    %v717 = vsub.f32 %v715, %v716
    %v718 = vand.u32 %v717, 4294901760
    %719 = vmatpush.msra.mxu0 %v718
    %v720 = vand.u32 %v35, 4294901760
    %v721 = vsub.f32 %v35, %v720
    %v722 = vand.u32 %v721, 4294901760
    %v723 = vsub.f32 %v721, %v722
    %v724 = vand.u32 %v723, 4294901760
    %725 = vmatpush.msra.mxu0 %v724
    %v726 = vand.u32 %v34, 4294901760
    %v727 = vsub.f32 %v34, %v726
    %v728 = vand.u32 %v727, 4294901760
    %v729 = vsub.f32 %v727, %v728
    %v730 = vand.u32 %v729, 4294901760
    %731 = vmatpush.msra.mxu0 %v730
    %v732 = vand.u32 %v665, 4294901760
    %733 = vmatmul.f32.gmra.mxu0 %v732
    %v734 = vpop.f32.mrf.mxu0
    %v735 = vadd.f32 %v694, %v734
    %736 = vdwg.mxu0
    %737 = vmatpush.msra.mxu0 0.0
    %738 = vmatpush.msra.mxu0 0.0
    %739 = vmatpush.msra.mxu0 0.0
    %740 = vmatpush.msra.mxu0 0.0
    %741 = vmatpush.msra.mxu0 0.0
    %742 = vmatpush.msra.mxu0 0.0
    %743 = vmatpush.msra.mxu0 0.0
    %744 = vmatpush.msra.mxu0 0.0
    %745 = vmatpush.msra.mxu0 0.0
    %746 = vmatpush.msra.mxu0 0.0
    %747 = vmatpush.msra.mxu0 0.0
    %748 = vmatpush.msra.mxu0 0.0
    %v749 = vand.u32 %v37, 4294901760
    %v750 = vsub.f32 %v37, %v749
    %751 = vmatpush.msra.mxu0 %v750
    %v752 = vand.u32 %v36, 4294901760
    %v753 = vsub.f32 %v36, %v752
    %754 = vmatpush.msra.mxu0 %v753
    %v755 = vand.u32 %v35, 4294901760
    %v756 = vsub.f32 %v35, %v755
    %757 = vmatpush.msra.mxu0 %v756
    %v758 = vand.u32 %v34, 4294901760
    %v759 = vsub.f32 %v34, %v758
    %760 = vmatpush.msra.mxu0 %v759
    %v761 = vand.u32 %v665, 4294901760
    %v762 = vsub.f32 %v665, %v761
    %763 = vmatmul.f32.gmra.mxu0 %v762
    %v764 = vpop.f32.mrf.mxu0
    %v765 = vadd.f32 %v735, %v764
    %766 = vdwg.mxu0
    %767 = vmatpush.msra.mxu0 0.0
    %768 = vmatpush.msra.mxu0 0.0
    %769 = vmatpush.msra.mxu0 0.0
    %770 = vmatpush.msra.mxu0 0.0
    %771 = vmatpush.msra.mxu0 0.0
    %772 = vmatpush.msra.mxu0 0.0
    %773 = vmatpush.msra.mxu0 0.0
    %774 = vmatpush.msra.mxu0 0.0
    %775 = vmatpush.msra.mxu0 0.0
    %776 = vmatpush.msra.mxu0 0.0
    %777 = vmatpush.msra.mxu0 0.0
    %778 = vmatpush.msra.mxu0 0.0
    %v779 = vand.u32 %v37, 4294901760
    %780 = vmatpush.msra.mxu0 %v779
    %v781 = vand.u32 %v36, 4294901760
    %782 = vmatpush.msra.mxu0 %v781
    %v783 = vand.u32 %v35, 4294901760
    %784 = vmatpush.msra.mxu0 %v783
    %v785 = vand.u32 %v34, 4294901760
    %786 = vmatpush.msra.mxu0 %v785
    %v787 = vand.u32 %v665, 4294901760
    %v788 = vsub.f32 %v665, %v787
    %v789 = vand.u32 %v788, 4294901760
    %790 = vmatmul.f32.gmra.mxu0 %v789
    %v791 = vpop.f32.mrf.mxu0
    %v792 = vadd.f32 %v765, %v791
    %793 = vdwg.mxu0
    %794 = vmatpush.msra.mxu0 0.0
    %795 = vmatpush.msra.mxu0 0.0
    %796 = vmatpush.msra.mxu0 0.0
    %797 = vmatpush.msra.mxu0 0.0
    %798 = vmatpush.msra.mxu0 0.0
    %799 = vmatpush.msra.mxu0 0.0
    %800 = vmatpush.msra.mxu0 0.0
    %801 = vmatpush.msra.mxu0 0.0
    %802 = vmatpush.msra.mxu0 0.0
    %803 = vmatpush.msra.mxu0 0.0
    %804 = vmatpush.msra.mxu0 0.0
    %805 = vmatpush.msra.mxu0 0.0
    %v806 = vand.u32 %v37, 4294901760
    %v807 = vsub.f32 %v37, %v806
    %v808 = vand.u32 %v807, 4294901760
    %809 = vmatpush.msra.mxu0 %v808
    %v810 = vand.u32 %v36, 4294901760
    %v811 = vsub.f32 %v36, %v810
    %v812 = vand.u32 %v811, 4294901760
    %813 = vmatpush.msra.mxu0 %v812
    %v814 = vand.u32 %v35, 4294901760
    %v815 = vsub.f32 %v35, %v814
    %v816 = vand.u32 %v815, 4294901760
    %817 = vmatpush.msra.mxu0 %v816
    %v818 = vand.u32 %v34, 4294901760
    %v819 = vsub.f32 %v34, %v818
    %v820 = vand.u32 %v819, 4294901760
    %821 = vmatpush.msra.mxu0 %v820
    %v822 = vand.u32 %v665, 4294901760
    %823 = vmatmul.f32.gmra.mxu0 %v822
    %v824 = vpop.f32.mrf.mxu0
    %v825 = vadd.f32 %v792, %v824
    %826 = vdwg.mxu0
    %827 = vmatpush.msra.mxu0 0.0
    %828 = vmatpush.msra.mxu0 0.0
    %829 = vmatpush.msra.mxu0 0.0
    %830 = vmatpush.msra.mxu0 0.0
    %831 = vmatpush.msra.mxu0 0.0
    %832 = vmatpush.msra.mxu0 0.0
    %833 = vmatpush.msra.mxu0 0.0
    %834 = vmatpush.msra.mxu0 0.0
    %835 = vmatpush.msra.mxu0 0.0
    %836 = vmatpush.msra.mxu0 0.0
    %837 = vmatpush.msra.mxu0 0.0
    %838 = vmatpush.msra.mxu0 0.0
    %v839 = vand.u32 %v37, 4294901760
    %840 = vmatpush.msra.mxu0 %v839
    %v841 = vand.u32 %v36, 4294901760
    %842 = vmatpush.msra.mxu0 %v841
    %v843 = vand.u32 %v35, 4294901760
    %844 = vmatpush.msra.mxu0 %v843
    %v845 = vand.u32 %v34, 4294901760
    %846 = vmatpush.msra.mxu0 %v845
    %v847 = vand.u32 %v665, 4294901760
    %848 = vmatmul.f32.gmra.mxu0 %v847
    %v849 = vpop.f32.mrf.mxu0
    %v850 = vadd.f32 %v825, %v849
    %851 = vdwg.mxu0
    %852 = vset.pattern.permute.xlu0 3
    %853 = vperm.xlu0 %852, %v32
    %v854 = vpop.permute.xlu0 %853
    %v856 = vmul.f32 %v854, %v238
    %v857 = vadd.f32 %v856, %v242
    %v858 = vadd.f32 %v857, %v850
    %v859 = vtanh.pop %v858
    %v860 = vmul.f32 %v859, %v248
    %v861 = vsel %vm251, %v860, 0.0
    %862 = vadd.xlane.f32.xlu0 %v861
    %v863 = vpop.xlane.xlu0 %862
    %vm864 = vcmp.eq.s32.totalorder %v41, 3
    %v865 = vsel %vm864, %v863, 0.0
    %v866 = vadd.f32 %v663, %v865
    %v868 = vsel %vm43, %v859, 0
    %870 = vmatpush.msra.mxu0 0.0
    %871 = vmatpush.msra.mxu0 0.0
    %872 = vmatpush.msra.mxu0 0.0
    %873 = vmatpush.msra.mxu0 0.0
    %874 = vmatpush.msra.mxu0 0.0
    %875 = vmatpush.msra.mxu0 0.0
    %876 = vmatpush.msra.mxu0 0.0
    %877 = vmatpush.msra.mxu0 0.0
    %878 = vmatpush.msra.mxu0 0.0
    %879 = vmatpush.msra.mxu0 0.0
    %880 = vmatpush.msra.mxu0 0.0
    %881 = vmatpush.msra.mxu0 0.0
    %v882 = vand.u32 %v37, 4294901760
    %883 = vmatpush.msra.mxu0 %v882
    %v884 = vand.u32 %v36, 4294901760
    %885 = vmatpush.msra.mxu0 %v884
    %v886 = vand.u32 %v35, 4294901760
    %887 = vmatpush.msra.mxu0 %v886
    %v888 = vand.u32 %v34, 4294901760
    %889 = vmatpush.msra.mxu0 %v888
    %v890 = vand.u32 %v868, 4294901760
    %v891 = vsub.f32 %v868, %v890
    %v892 = vand.u32 %v891, 4294901760
    %v893 = vsub.f32 %v891, %v892
    %v894 = vand.u32 %v893, 4294901760
    %895 = vmatmul.f32.gmra.mxu0 %v894
    %v896 = vpop.f32.mrf.mxu0
    %v897 = vadd.f32 0.0, %v896
    %898 = vdwg.mxu0
    %899 = vmatpush.msra.mxu0 0.0
    %900 = vmatpush.msra.mxu0 0.0
    %901 = vmatpush.msra.mxu0 0.0
    %902 = vmatpush.msra.mxu0 0.0
    %903 = vmatpush.msra.mxu0 0.0
    %904 = vmatpush.msra.mxu0 0.0
    %905 = vmatpush.msra.mxu0 0.0
    %906 = vmatpush.msra.mxu0 0.0
    %907 = vmatpush.msra.mxu0 0.0
    %908 = vmatpush.msra.mxu0 0.0
    %909 = vmatpush.msra.mxu0 0.0
    %910 = vmatpush.msra.mxu0 0.0
    %v911 = vand.u32 %v37, 4294901760
    %v912 = vsub.f32 %v37, %v911
    %v913 = vand.u32 %v912, 4294901760
    %v914 = vsub.f32 %v912, %v913
    %v915 = vand.u32 %v914, 4294901760
    %916 = vmatpush.msra.mxu0 %v915
    %v917 = vand.u32 %v36, 4294901760
    %v918 = vsub.f32 %v36, %v917
    %v919 = vand.u32 %v918, 4294901760
    %v920 = vsub.f32 %v918, %v919
    %v921 = vand.u32 %v920, 4294901760
    %922 = vmatpush.msra.mxu0 %v921
    %v923 = vand.u32 %v35, 4294901760
    %v924 = vsub.f32 %v35, %v923
    %v925 = vand.u32 %v924, 4294901760
    %v926 = vsub.f32 %v924, %v925
    %v927 = vand.u32 %v926, 4294901760
    %928 = vmatpush.msra.mxu0 %v927
    %v929 = vand.u32 %v34, 4294901760
    %v930 = vsub.f32 %v34, %v929
    %v931 = vand.u32 %v930, 4294901760
    %v932 = vsub.f32 %v930, %v931
    %v933 = vand.u32 %v932, 4294901760
    %934 = vmatpush.msra.mxu0 %v933
    %v935 = vand.u32 %v868, 4294901760
    %936 = vmatmul.f32.gmra.mxu0 %v935
    %v937 = vpop.f32.mrf.mxu0
    %v938 = vadd.f32 %v897, %v937
    %939 = vdwg.mxu0
    %940 = vmatpush.msra.mxu0 0.0
    %941 = vmatpush.msra.mxu0 0.0
    %942 = vmatpush.msra.mxu0 0.0
    %943 = vmatpush.msra.mxu0 0.0
    %944 = vmatpush.msra.mxu0 0.0
    %945 = vmatpush.msra.mxu0 0.0
    %946 = vmatpush.msra.mxu0 0.0
    %947 = vmatpush.msra.mxu0 0.0
    %948 = vmatpush.msra.mxu0 0.0
    %949 = vmatpush.msra.mxu0 0.0
    %950 = vmatpush.msra.mxu0 0.0
    %951 = vmatpush.msra.mxu0 0.0
    %v952 = vand.u32 %v37, 4294901760
    %v953 = vsub.f32 %v37, %v952
    %954 = vmatpush.msra.mxu0 %v953
    %v955 = vand.u32 %v36, 4294901760
    %v956 = vsub.f32 %v36, %v955
    %957 = vmatpush.msra.mxu0 %v956
    %v958 = vand.u32 %v35, 4294901760
    %v959 = vsub.f32 %v35, %v958
    %960 = vmatpush.msra.mxu0 %v959
    %v961 = vand.u32 %v34, 4294901760
    %v962 = vsub.f32 %v34, %v961
    %963 = vmatpush.msra.mxu0 %v962
    %v964 = vand.u32 %v868, 4294901760
    %v965 = vsub.f32 %v868, %v964
    %966 = vmatmul.f32.gmra.mxu0 %v965
    %v967 = vpop.f32.mrf.mxu0
    %v968 = vadd.f32 %v938, %v967
    %969 = vdwg.mxu0
    %970 = vmatpush.msra.mxu0 0.0
    %971 = vmatpush.msra.mxu0 0.0
    %972 = vmatpush.msra.mxu0 0.0
    %973 = vmatpush.msra.mxu0 0.0
    %974 = vmatpush.msra.mxu0 0.0
    %975 = vmatpush.msra.mxu0 0.0
    %976 = vmatpush.msra.mxu0 0.0
    %977 = vmatpush.msra.mxu0 0.0
    %978 = vmatpush.msra.mxu0 0.0
    %979 = vmatpush.msra.mxu0 0.0
    %980 = vmatpush.msra.mxu0 0.0
    %981 = vmatpush.msra.mxu0 0.0
    %v982 = vand.u32 %v37, 4294901760
    %983 = vmatpush.msra.mxu0 %v982
    %v984 = vand.u32 %v36, 4294901760
    %985 = vmatpush.msra.mxu0 %v984
    %v986 = vand.u32 %v35, 4294901760
    %987 = vmatpush.msra.mxu0 %v986
    %v988 = vand.u32 %v34, 4294901760
    %989 = vmatpush.msra.mxu0 %v988
    %v990 = vand.u32 %v868, 4294901760
    %v991 = vsub.f32 %v868, %v990
    %v992 = vand.u32 %v991, 4294901760
    %993 = vmatmul.f32.gmra.mxu0 %v992
    %v994 = vpop.f32.mrf.mxu0
    %v995 = vadd.f32 %v968, %v994
    %996 = vdwg.mxu0
    %997 = vmatpush.msra.mxu0 0.0
    %998 = vmatpush.msra.mxu0 0.0
    %999 = vmatpush.msra.mxu0 0.0
    %1000 = vmatpush.msra.mxu0 0.0
    %1001 = vmatpush.msra.mxu0 0.0
    %1002 = vmatpush.msra.mxu0 0.0
    %1003 = vmatpush.msra.mxu0 0.0
    %1004 = vmatpush.msra.mxu0 0.0
    %1005 = vmatpush.msra.mxu0 0.0
    %1006 = vmatpush.msra.mxu0 0.0
    %1007 = vmatpush.msra.mxu0 0.0
    %1008 = vmatpush.msra.mxu0 0.0
    %v1009 = vand.u32 %v37, 4294901760
    %v1010 = vsub.f32 %v37, %v1009
    %v1011 = vand.u32 %v1010, 4294901760
    %1012 = vmatpush.msra.mxu0 %v1011
    %v1013 = vand.u32 %v36, 4294901760
    %v1014 = vsub.f32 %v36, %v1013
    %v1015 = vand.u32 %v1014, 4294901760
    %1016 = vmatpush.msra.mxu0 %v1015
    %v1017 = vand.u32 %v35, 4294901760
    %v1018 = vsub.f32 %v35, %v1017
    %v1019 = vand.u32 %v1018, 4294901760
    %1020 = vmatpush.msra.mxu0 %v1019
    %v1021 = vand.u32 %v34, 4294901760
    %v1022 = vsub.f32 %v34, %v1021
    %v1023 = vand.u32 %v1022, 4294901760
    %1024 = vmatpush.msra.mxu0 %v1023
    %v1025 = vand.u32 %v868, 4294901760
    %1026 = vmatmul.f32.gmra.mxu0 %v1025
    %v1027 = vpop.f32.mrf.mxu0
    %v1028 = vadd.f32 %v995, %v1027
    %1029 = vdwg.mxu0
    %1030 = vmatpush.msra.mxu0 0.0
    %1031 = vmatpush.msra.mxu0 0.0
    %1032 = vmatpush.msra.mxu0 0.0
    %1033 = vmatpush.msra.mxu0 0.0
    %1034 = vmatpush.msra.mxu0 0.0
    %1035 = vmatpush.msra.mxu0 0.0
    %1036 = vmatpush.msra.mxu0 0.0
    %1037 = vmatpush.msra.mxu0 0.0
    %1038 = vmatpush.msra.mxu0 0.0
    %1039 = vmatpush.msra.mxu0 0.0
    %1040 = vmatpush.msra.mxu0 0.0
    %1041 = vmatpush.msra.mxu0 0.0
    %v1042 = vand.u32 %v37, 4294901760
    %1043 = vmatpush.msra.mxu0 %v1042
    %v1044 = vand.u32 %v36, 4294901760
    %1045 = vmatpush.msra.mxu0 %v1044
    %v1046 = vand.u32 %v35, 4294901760
    %1047 = vmatpush.msra.mxu0 %v1046
    %v1048 = vand.u32 %v34, 4294901760
    %1049 = vmatpush.msra.mxu0 %v1048
    %v1050 = vand.u32 %v868, 4294901760
    %1051 = vmatmul.f32.gmra.mxu0 %v1050
    %v1052 = vpop.f32.mrf.mxu0
    %v1053 = vadd.f32 %v1028, %v1052
    %1054 = vdwg.mxu0
    %1055 = vset.pattern.permute.xlu0 4
    %1056 = vperm.xlu0 %1055, %v32
    %v1057 = vpop.permute.xlu0 %1056
    %v1059 = vmul.f32 %v1057, %v238
    %v1060 = vadd.f32 %v1059, %v242
    %v1061 = vadd.f32 %v1060, %v1053
    %v1062 = vtanh.pop %v1061
    %v1063 = vmul.f32 %v1062, %v248
    %v1064 = vsel %vm251, %v1063, 0.0
    %1065 = vadd.xlane.f32.xlu0 %v1064
    %v1066 = vpop.xlane.xlu0 %1065
    %vm1067 = vcmp.eq.s32.totalorder %v41, 4
    %v1068 = vsel %vm1067, %v1066, 0.0
    %v1069 = vadd.f32 %v866, %v1068
    %v1071 = vsel %vm43, %v1062, 0
    %1073 = vmatpush.msra.mxu0 0.0
    %1074 = vmatpush.msra.mxu0 0.0
    %1075 = vmatpush.msra.mxu0 0.0
    %1076 = vmatpush.msra.mxu0 0.0
    %1077 = vmatpush.msra.mxu0 0.0
    %1078 = vmatpush.msra.mxu0 0.0
    %1079 = vmatpush.msra.mxu0 0.0
    %1080 = vmatpush.msra.mxu0 0.0
    %1081 = vmatpush.msra.mxu0 0.0
    %1082 = vmatpush.msra.mxu0 0.0
    %1083 = vmatpush.msra.mxu0 0.0
    %1084 = vmatpush.msra.mxu0 0.0
    %v1085 = vand.u32 %v37, 4294901760
    %1086 = vmatpush.msra.mxu0 %v1085
    %v1087 = vand.u32 %v36, 4294901760
    %1088 = vmatpush.msra.mxu0 %v1087
    %v1089 = vand.u32 %v35, 4294901760
    %1090 = vmatpush.msra.mxu0 %v1089
    %v1091 = vand.u32 %v34, 4294901760
    %1092 = vmatpush.msra.mxu0 %v1091
    %v1093 = vand.u32 %v1071, 4294901760
    %v1094 = vsub.f32 %v1071, %v1093
    %v1095 = vand.u32 %v1094, 4294901760
    %v1096 = vsub.f32 %v1094, %v1095
    %v1097 = vand.u32 %v1096, 4294901760
    %1098 = vmatmul.f32.gmra.mxu0 %v1097
    %v1099 = vpop.f32.mrf.mxu0
    %v1100 = vadd.f32 0.0, %v1099
    %1101 = vdwg.mxu0
    %1102 = vmatpush.msra.mxu0 0.0
    %1103 = vmatpush.msra.mxu0 0.0
    %1104 = vmatpush.msra.mxu0 0.0
    %1105 = vmatpush.msra.mxu0 0.0
    %1106 = vmatpush.msra.mxu0 0.0
    %1107 = vmatpush.msra.mxu0 0.0
    %1108 = vmatpush.msra.mxu0 0.0
    %1109 = vmatpush.msra.mxu0 0.0
    %1110 = vmatpush.msra.mxu0 0.0
    %1111 = vmatpush.msra.mxu0 0.0
    %1112 = vmatpush.msra.mxu0 0.0
    %1113 = vmatpush.msra.mxu0 0.0
    %v1114 = vand.u32 %v37, 4294901760
    %v1115 = vsub.f32 %v37, %v1114
    %v1116 = vand.u32 %v1115, 4294901760
    %v1117 = vsub.f32 %v1115, %v1116
    %v1118 = vand.u32 %v1117, 4294901760
    %1119 = vmatpush.msra.mxu0 %v1118
    %v1120 = vand.u32 %v36, 4294901760
    %v1121 = vsub.f32 %v36, %v1120
    %v1122 = vand.u32 %v1121, 4294901760
    %v1123 = vsub.f32 %v1121, %v1122
    %v1124 = vand.u32 %v1123, 4294901760
    %1125 = vmatpush.msra.mxu0 %v1124
    %v1126 = vand.u32 %v35, 4294901760
    %v1127 = vsub.f32 %v35, %v1126
    %v1128 = vand.u32 %v1127, 4294901760
    %v1129 = vsub.f32 %v1127, %v1128
    %v1130 = vand.u32 %v1129, 4294901760
    %1131 = vmatpush.msra.mxu0 %v1130
    %v1132 = vand.u32 %v34, 4294901760
    %v1133 = vsub.f32 %v34, %v1132
    %v1134 = vand.u32 %v1133, 4294901760
    %v1135 = vsub.f32 %v1133, %v1134
    %v1136 = vand.u32 %v1135, 4294901760
    %1137 = vmatpush.msra.mxu0 %v1136
    %v1138 = vand.u32 %v1071, 4294901760
    %1139 = vmatmul.f32.gmra.mxu0 %v1138
    %v1140 = vpop.f32.mrf.mxu0
    %v1141 = vadd.f32 %v1100, %v1140
    %1142 = vdwg.mxu0
    %1143 = vmatpush.msra.mxu0 0.0
    %1144 = vmatpush.msra.mxu0 0.0
    %1145 = vmatpush.msra.mxu0 0.0
    %1146 = vmatpush.msra.mxu0 0.0
    %1147 = vmatpush.msra.mxu0 0.0
    %1148 = vmatpush.msra.mxu0 0.0
    %1149 = vmatpush.msra.mxu0 0.0
    %1150 = vmatpush.msra.mxu0 0.0
    %1151 = vmatpush.msra.mxu0 0.0
    %1152 = vmatpush.msra.mxu0 0.0
    %1153 = vmatpush.msra.mxu0 0.0
    %1154 = vmatpush.msra.mxu0 0.0
    %v1155 = vand.u32 %v37, 4294901760
    %v1156 = vsub.f32 %v37, %v1155
    %1157 = vmatpush.msra.mxu0 %v1156
    %v1158 = vand.u32 %v36, 4294901760
    %v1159 = vsub.f32 %v36, %v1158
    %1160 = vmatpush.msra.mxu0 %v1159
    %v1161 = vand.u32 %v35, 4294901760
    %v1162 = vsub.f32 %v35, %v1161
    %1163 = vmatpush.msra.mxu0 %v1162
    %v1164 = vand.u32 %v34, 4294901760
    %v1165 = vsub.f32 %v34, %v1164
    %1166 = vmatpush.msra.mxu0 %v1165
    %v1167 = vand.u32 %v1071, 4294901760
    %v1168 = vsub.f32 %v1071, %v1167
    %1169 = vmatmul.f32.gmra.mxu0 %v1168
    %v1170 = vpop.f32.mrf.mxu0
    %v1171 = vadd.f32 %v1141, %v1170
    %1172 = vdwg.mxu0
    %1173 = vmatpush.msra.mxu0 0.0
    %1174 = vmatpush.msra.mxu0 0.0
    %1175 = vmatpush.msra.mxu0 0.0
    %1176 = vmatpush.msra.mxu0 0.0
    %1177 = vmatpush.msra.mxu0 0.0
    %1178 = vmatpush.msra.mxu0 0.0
    %1179 = vmatpush.msra.mxu0 0.0
    %1180 = vmatpush.msra.mxu0 0.0
    %1181 = vmatpush.msra.mxu0 0.0
    %1182 = vmatpush.msra.mxu0 0.0
    %1183 = vmatpush.msra.mxu0 0.0
    %1184 = vmatpush.msra.mxu0 0.0
    %v1185 = vand.u32 %v37, 4294901760
    %1186 = vmatpush.msra.mxu0 %v1185
    %v1187 = vand.u32 %v36, 4294901760
    %1188 = vmatpush.msra.mxu0 %v1187
    %v1189 = vand.u32 %v35, 4294901760
    %1190 = vmatpush.msra.mxu0 %v1189
    %v1191 = vand.u32 %v34, 4294901760
    %1192 = vmatpush.msra.mxu0 %v1191
    %v1193 = vand.u32 %v1071, 4294901760
    %v1194 = vsub.f32 %v1071, %v1193
    %v1195 = vand.u32 %v1194, 4294901760
    %1196 = vmatmul.f32.gmra.mxu0 %v1195
    %v1197 = vpop.f32.mrf.mxu0
    %v1198 = vadd.f32 %v1171, %v1197
    %1199 = vdwg.mxu0
    %1200 = vmatpush.msra.mxu0 0.0
    %1201 = vmatpush.msra.mxu0 0.0
    %1202 = vmatpush.msra.mxu0 0.0
    %1203 = vmatpush.msra.mxu0 0.0
    %1204 = vmatpush.msra.mxu0 0.0
    %1205 = vmatpush.msra.mxu0 0.0
    %1206 = vmatpush.msra.mxu0 0.0
    %1207 = vmatpush.msra.mxu0 0.0
    %1208 = vmatpush.msra.mxu0 0.0
    %1209 = vmatpush.msra.mxu0 0.0
    %1210 = vmatpush.msra.mxu0 0.0
    %1211 = vmatpush.msra.mxu0 0.0
    %v1212 = vand.u32 %v37, 4294901760
    %v1213 = vsub.f32 %v37, %v1212
    %v1214 = vand.u32 %v1213, 4294901760
    %1215 = vmatpush.msra.mxu0 %v1214
    %v1216 = vand.u32 %v36, 4294901760
    %v1217 = vsub.f32 %v36, %v1216
    %v1218 = vand.u32 %v1217, 4294901760
    %1219 = vmatpush.msra.mxu0 %v1218
    %v1220 = vand.u32 %v35, 4294901760
    %v1221 = vsub.f32 %v35, %v1220
    %v1222 = vand.u32 %v1221, 4294901760
    %1223 = vmatpush.msra.mxu0 %v1222
    %v1224 = vand.u32 %v34, 4294901760
    %v1225 = vsub.f32 %v34, %v1224
    %v1226 = vand.u32 %v1225, 4294901760
    %1227 = vmatpush.msra.mxu0 %v1226
    %v1228 = vand.u32 %v1071, 4294901760
    %1229 = vmatmul.f32.gmra.mxu0 %v1228
    %v1230 = vpop.f32.mrf.mxu0
    %v1231 = vadd.f32 %v1198, %v1230
    %1232 = vdwg.mxu0
    %1233 = vmatpush.msra.mxu0 0.0
    %1234 = vmatpush.msra.mxu0 0.0
    %1235 = vmatpush.msra.mxu0 0.0
    %1236 = vmatpush.msra.mxu0 0.0
    %1237 = vmatpush.msra.mxu0 0.0
    %1238 = vmatpush.msra.mxu0 0.0
    %1239 = vmatpush.msra.mxu0 0.0
    %1240 = vmatpush.msra.mxu0 0.0
    %1241 = vmatpush.msra.mxu0 0.0
    %1242 = vmatpush.msra.mxu0 0.0
    %1243 = vmatpush.msra.mxu0 0.0
    %1244 = vmatpush.msra.mxu0 0.0
    %v1245 = vand.u32 %v37, 4294901760
    %1246 = vmatpush.msra.mxu0 %v1245
    %v1247 = vand.u32 %v36, 4294901760
    %1248 = vmatpush.msra.mxu0 %v1247
    %v1249 = vand.u32 %v35, 4294901760
    %1250 = vmatpush.msra.mxu0 %v1249
    %v1251 = vand.u32 %v34, 4294901760
    %1252 = vmatpush.msra.mxu0 %v1251
    %v1253 = vand.u32 %v1071, 4294901760
    %1254 = vmatmul.f32.gmra.mxu0 %v1253
    %v1255 = vpop.f32.mrf.mxu0
    %v1256 = vadd.f32 %v1231, %v1255
    %1257 = vdwg.mxu0
    %1258 = vset.pattern.permute.xlu0 5
    %1259 = vperm.xlu0 %1258, %v32
    %v1260 = vpop.permute.xlu0 %1259
    %v1262 = vmul.f32 %v1260, %v238
    %v1263 = vadd.f32 %v1262, %v242
    %v1264 = vadd.f32 %v1263, %v1256
    %v1265 = vtanh.pop %v1264
    %v1266 = vmul.f32 %v1265, %v248
    %v1267 = vsel %vm251, %v1266, 0.0
    %1268 = vadd.xlane.f32.xlu0 %v1267
    %v1269 = vpop.xlane.xlu0 %1268
    %vm1270 = vcmp.eq.s32.totalorder %v41, 5
    %v1271 = vsel %vm1270, %v1269, 0.0
    %v1272 = vadd.f32 %v1069, %v1271
    %v1274 = vsel %vm43, %v1265, 0
    %1276 = vmatpush.msra.mxu0 0.0
    %1277 = vmatpush.msra.mxu0 0.0
    %1278 = vmatpush.msra.mxu0 0.0
    %1279 = vmatpush.msra.mxu0 0.0
    %1280 = vmatpush.msra.mxu0 0.0
    %1281 = vmatpush.msra.mxu0 0.0
    %1282 = vmatpush.msra.mxu0 0.0
    %1283 = vmatpush.msra.mxu0 0.0
    %1284 = vmatpush.msra.mxu0 0.0
    %1285 = vmatpush.msra.mxu0 0.0
    %1286 = vmatpush.msra.mxu0 0.0
    %1287 = vmatpush.msra.mxu0 0.0
    %v1288 = vand.u32 %v37, 4294901760
    %1289 = vmatpush.msra.mxu0 %v1288
    %v1290 = vand.u32 %v36, 4294901760
    %1291 = vmatpush.msra.mxu0 %v1290
    %v1292 = vand.u32 %v35, 4294901760
    %1293 = vmatpush.msra.mxu0 %v1292
    %v1294 = vand.u32 %v34, 4294901760
    %1295 = vmatpush.msra.mxu0 %v1294
    %v1296 = vand.u32 %v1274, 4294901760
    %v1297 = vsub.f32 %v1274, %v1296
    %v1298 = vand.u32 %v1297, 4294901760
    %v1299 = vsub.f32 %v1297, %v1298
    %v1300 = vand.u32 %v1299, 4294901760
    %1301 = vmatmul.f32.gmra.mxu0 %v1300
    %v1302 = vpop.f32.mrf.mxu0
    %v1303 = vadd.f32 0.0, %v1302
    %1304 = vdwg.mxu0
    %1305 = vmatpush.msra.mxu0 0.0
    %1306 = vmatpush.msra.mxu0 0.0
    %1307 = vmatpush.msra.mxu0 0.0
    %1308 = vmatpush.msra.mxu0 0.0
    %1309 = vmatpush.msra.mxu0 0.0
    %1310 = vmatpush.msra.mxu0 0.0
    %1311 = vmatpush.msra.mxu0 0.0
    %1312 = vmatpush.msra.mxu0 0.0
    %1313 = vmatpush.msra.mxu0 0.0
    %1314 = vmatpush.msra.mxu0 0.0
    %1315 = vmatpush.msra.mxu0 0.0
    %1316 = vmatpush.msra.mxu0 0.0
    %v1317 = vand.u32 %v37, 4294901760
    %v1318 = vsub.f32 %v37, %v1317
    %v1319 = vand.u32 %v1318, 4294901760
    %v1320 = vsub.f32 %v1318, %v1319
    %v1321 = vand.u32 %v1320, 4294901760
    %1322 = vmatpush.msra.mxu0 %v1321
    %v1323 = vand.u32 %v36, 4294901760
    %v1324 = vsub.f32 %v36, %v1323
    %v1325 = vand.u32 %v1324, 4294901760
    %v1326 = vsub.f32 %v1324, %v1325
    %v1327 = vand.u32 %v1326, 4294901760
    %1328 = vmatpush.msra.mxu0 %v1327
    %v1329 = vand.u32 %v35, 4294901760
    %v1330 = vsub.f32 %v35, %v1329
    %v1331 = vand.u32 %v1330, 4294901760
    %v1332 = vsub.f32 %v1330, %v1331
    %v1333 = vand.u32 %v1332, 4294901760
    %1334 = vmatpush.msra.mxu0 %v1333
    %v1335 = vand.u32 %v34, 4294901760
    %v1336 = vsub.f32 %v34, %v1335
    %v1337 = vand.u32 %v1336, 4294901760
    %v1338 = vsub.f32 %v1336, %v1337
    %v1339 = vand.u32 %v1338, 4294901760
    %1340 = vmatpush.msra.mxu0 %v1339
    %v1341 = vand.u32 %v1274, 4294901760
    %1342 = vmatmul.f32.gmra.mxu0 %v1341
    %v1343 = vpop.f32.mrf.mxu0
    %v1344 = vadd.f32 %v1303, %v1343
    %1345 = vdwg.mxu0
    %1346 = vmatpush.msra.mxu0 0.0
    %1347 = vmatpush.msra.mxu0 0.0
    %1348 = vmatpush.msra.mxu0 0.0
    %1349 = vmatpush.msra.mxu0 0.0
    %1350 = vmatpush.msra.mxu0 0.0
    %1351 = vmatpush.msra.mxu0 0.0
    %1352 = vmatpush.msra.mxu0 0.0
    %1353 = vmatpush.msra.mxu0 0.0
    %1354 = vmatpush.msra.mxu0 0.0
    %1355 = vmatpush.msra.mxu0 0.0
    %1356 = vmatpush.msra.mxu0 0.0
    %1357 = vmatpush.msra.mxu0 0.0
    %v1358 = vand.u32 %v37, 4294901760
    %v1359 = vsub.f32 %v37, %v1358
    %1360 = vmatpush.msra.mxu0 %v1359
    %v1361 = vand.u32 %v36, 4294901760
    %v1362 = vsub.f32 %v36, %v1361
    %1363 = vmatpush.msra.mxu0 %v1362
    %v1364 = vand.u32 %v35, 4294901760
    %v1365 = vsub.f32 %v35, %v1364
    %1366 = vmatpush.msra.mxu0 %v1365
    %v1367 = vand.u32 %v34, 4294901760
    %v1368 = vsub.f32 %v34, %v1367
    %1369 = vmatpush.msra.mxu0 %v1368
    %v1370 = vand.u32 %v1274, 4294901760
    %v1371 = vsub.f32 %v1274, %v1370
    %1372 = vmatmul.f32.gmra.mxu0 %v1371
    %v1373 = vpop.f32.mrf.mxu0
    %v1374 = vadd.f32 %v1344, %v1373
    %1375 = vdwg.mxu0
    %1376 = vmatpush.msra.mxu0 0.0
    %1377 = vmatpush.msra.mxu0 0.0
    %1378 = vmatpush.msra.mxu0 0.0
    %1379 = vmatpush.msra.mxu0 0.0
    %1380 = vmatpush.msra.mxu0 0.0
    %1381 = vmatpush.msra.mxu0 0.0
    %1382 = vmatpush.msra.mxu0 0.0
    %1383 = vmatpush.msra.mxu0 0.0
    %1384 = vmatpush.msra.mxu0 0.0
    %1385 = vmatpush.msra.mxu0 0.0
    %1386 = vmatpush.msra.mxu0 0.0
    %1387 = vmatpush.msra.mxu0 0.0
    %v1388 = vand.u32 %v37, 4294901760
    %1389 = vmatpush.msra.mxu0 %v1388
    %v1390 = vand.u32 %v36, 4294901760
    %1391 = vmatpush.msra.mxu0 %v1390
    %v1392 = vand.u32 %v35, 4294901760
    %1393 = vmatpush.msra.mxu0 %v1392
    %v1394 = vand.u32 %v34, 4294901760
    %1395 = vmatpush.msra.mxu0 %v1394
    %v1396 = vand.u32 %v1274, 4294901760
    %v1397 = vsub.f32 %v1274, %v1396
    %v1398 = vand.u32 %v1397, 4294901760
    %1399 = vmatmul.f32.gmra.mxu0 %v1398
    %v1400 = vpop.f32.mrf.mxu0
    %v1401 = vadd.f32 %v1374, %v1400
    %1402 = vdwg.mxu0
    %1403 = vmatpush.msra.mxu0 0.0
    %1404 = vmatpush.msra.mxu0 0.0
    %1405 = vmatpush.msra.mxu0 0.0
    %1406 = vmatpush.msra.mxu0 0.0
    %1407 = vmatpush.msra.mxu0 0.0
    %1408 = vmatpush.msra.mxu0 0.0
    %1409 = vmatpush.msra.mxu0 0.0
    %1410 = vmatpush.msra.mxu0 0.0
    %1411 = vmatpush.msra.mxu0 0.0
    %1412 = vmatpush.msra.mxu0 0.0
    %1413 = vmatpush.msra.mxu0 0.0
    %1414 = vmatpush.msra.mxu0 0.0
    %v1415 = vand.u32 %v37, 4294901760
    %v1416 = vsub.f32 %v37, %v1415
    %v1417 = vand.u32 %v1416, 4294901760
    %1418 = vmatpush.msra.mxu0 %v1417
    %v1419 = vand.u32 %v36, 4294901760
    %v1420 = vsub.f32 %v36, %v1419
    %v1421 = vand.u32 %v1420, 4294901760
    %1422 = vmatpush.msra.mxu0 %v1421
    %v1423 = vand.u32 %v35, 4294901760
    %v1424 = vsub.f32 %v35, %v1423
    %v1425 = vand.u32 %v1424, 4294901760
    %1426 = vmatpush.msra.mxu0 %v1425
    %v1427 = vand.u32 %v34, 4294901760
    %v1428 = vsub.f32 %v34, %v1427
    %v1429 = vand.u32 %v1428, 4294901760
    %1430 = vmatpush.msra.mxu0 %v1429
    %v1431 = vand.u32 %v1274, 4294901760
    %1432 = vmatmul.f32.gmra.mxu0 %v1431
    %v1433 = vpop.f32.mrf.mxu0
    %v1434 = vadd.f32 %v1401, %v1433
    %1435 = vdwg.mxu0
    %1436 = vmatpush.msra.mxu0 0.0
    %1437 = vmatpush.msra.mxu0 0.0
    %1438 = vmatpush.msra.mxu0 0.0
    %1439 = vmatpush.msra.mxu0 0.0
    %1440 = vmatpush.msra.mxu0 0.0
    %1441 = vmatpush.msra.mxu0 0.0
    %1442 = vmatpush.msra.mxu0 0.0
    %1443 = vmatpush.msra.mxu0 0.0
    %1444 = vmatpush.msra.mxu0 0.0
    %1445 = vmatpush.msra.mxu0 0.0
    %1446 = vmatpush.msra.mxu0 0.0
    %1447 = vmatpush.msra.mxu0 0.0
    %v1448 = vand.u32 %v37, 4294901760
    %1449 = vmatpush.msra.mxu0 %v1448
    %v1450 = vand.u32 %v36, 4294901760
    %1451 = vmatpush.msra.mxu0 %v1450
    %v1452 = vand.u32 %v35, 4294901760
    %1453 = vmatpush.msra.mxu0 %v1452
    %v1454 = vand.u32 %v34, 4294901760
    %1455 = vmatpush.msra.mxu0 %v1454
    %v1456 = vand.u32 %v1274, 4294901760
    %1457 = vmatmul.f32.gmra.mxu0 %v1456
    %v1458 = vpop.f32.mrf.mxu0
    %v1459 = vadd.f32 %v1434, %v1458
    %1460 = vdwg.mxu0
    %1461 = vset.pattern.permute.xlu0 6
    %1462 = vperm.xlu0 %1461, %v32
    %v1463 = vpop.permute.xlu0 %1462
    %v1465 = vmul.f32 %v1463, %v238
    %v1466 = vadd.f32 %v1465, %v242
    %v1467 = vadd.f32 %v1466, %v1459
    %v1468 = vtanh.pop %v1467
    %v1469 = vmul.f32 %v1468, %v248
    %v1470 = vsel %vm251, %v1469, 0.0
    %1471 = vadd.xlane.f32.xlu0 %v1470
    %v1472 = vpop.xlane.xlu0 %1471
    %vm1473 = vcmp.eq.s32.totalorder %v41, 6
    %v1474 = vsel %vm1473, %v1472, 0.0
    %v1475 = vadd.f32 %v1272, %v1474
    %v1477 = vsel %vm43, %v1468, 0
    %1479 = vmatpush.msra.mxu0 0.0
    %1480 = vmatpush.msra.mxu0 0.0
    %1481 = vmatpush.msra.mxu0 0.0
    %1482 = vmatpush.msra.mxu0 0.0
    %1483 = vmatpush.msra.mxu0 0.0
    %1484 = vmatpush.msra.mxu0 0.0
    %1485 = vmatpush.msra.mxu0 0.0
    %1486 = vmatpush.msra.mxu0 0.0
    %1487 = vmatpush.msra.mxu0 0.0
    %1488 = vmatpush.msra.mxu0 0.0
    %1489 = vmatpush.msra.mxu0 0.0
    %1490 = vmatpush.msra.mxu0 0.0
    %v1491 = vand.u32 %v37, 4294901760
    %1492 = vmatpush.msra.mxu0 %v1491
    %v1493 = vand.u32 %v36, 4294901760
    %1494 = vmatpush.msra.mxu0 %v1493
    %v1495 = vand.u32 %v35, 4294901760
    %1496 = vmatpush.msra.mxu0 %v1495
    %v1497 = vand.u32 %v34, 4294901760
    %1498 = vmatpush.msra.mxu0 %v1497
    %v1499 = vand.u32 %v1477, 4294901760
    %v1500 = vsub.f32 %v1477, %v1499
    %v1501 = vand.u32 %v1500, 4294901760
    %v1502 = vsub.f32 %v1500, %v1501
    %v1503 = vand.u32 %v1502, 4294901760
    %1504 = vmatmul.f32.gmra.mxu0 %v1503
    %v1505 = vpop.f32.mrf.mxu0
    %v1506 = vadd.f32 0.0, %v1505
    %1507 = vdwg.mxu0
    %1508 = vmatpush.msra.mxu0 0.0
    %1509 = vmatpush.msra.mxu0 0.0
    %1510 = vmatpush.msra.mxu0 0.0
    %1511 = vmatpush.msra.mxu0 0.0
    %1512 = vmatpush.msra.mxu0 0.0
    %1513 = vmatpush.msra.mxu0 0.0
    %1514 = vmatpush.msra.mxu0 0.0
    %1515 = vmatpush.msra.mxu0 0.0
    %1516 = vmatpush.msra.mxu0 0.0
    %1517 = vmatpush.msra.mxu0 0.0
    %1518 = vmatpush.msra.mxu0 0.0
    %1519 = vmatpush.msra.mxu0 0.0
    %v1520 = vand.u32 %v37, 4294901760
    %v1521 = vsub.f32 %v37, %v1520
    %v1522 = vand.u32 %v1521, 4294901760
    %v1523 = vsub.f32 %v1521, %v1522
    %v1524 = vand.u32 %v1523, 4294901760
    %1525 = vmatpush.msra.mxu0 %v1524
    %v1526 = vand.u32 %v36, 4294901760
    %v1527 = vsub.f32 %v36, %v1526
    %v1528 = vand.u32 %v1527, 4294901760
    %v1529 = vsub.f32 %v1527, %v1528
    %v1530 = vand.u32 %v1529, 4294901760
    %1531 = vmatpush.msra.mxu0 %v1530
    %v1532 = vand.u32 %v35, 4294901760
    %v1533 = vsub.f32 %v35, %v1532
    %v1534 = vand.u32 %v1533, 4294901760
    %v1535 = vsub.f32 %v1533, %v1534
    %v1536 = vand.u32 %v1535, 4294901760
    %1537 = vmatpush.msra.mxu0 %v1536
    %v1538 = vand.u32 %v34, 4294901760
    %v1539 = vsub.f32 %v34, %v1538
    %v1540 = vand.u32 %v1539, 4294901760
    %v1541 = vsub.f32 %v1539, %v1540
    %v1542 = vand.u32 %v1541, 4294901760
    %1543 = vmatpush.msra.mxu0 %v1542
    %v1544 = vand.u32 %v1477, 4294901760
    %1545 = vmatmul.f32.gmra.mxu0 %v1544
    %v1546 = vpop.f32.mrf.mxu0
    %v1547 = vadd.f32 %v1506, %v1546
    %1548 = vdwg.mxu0
    %1549 = vmatpush.msra.mxu0 0.0
    %1550 = vmatpush.msra.mxu0 0.0
    %1551 = vmatpush.msra.mxu0 0.0
    %1552 = vmatpush.msra.mxu0 0.0
    %1553 = vmatpush.msra.mxu0 0.0
    %1554 = vmatpush.msra.mxu0 0.0
    %1555 = vmatpush.msra.mxu0 0.0
    %1556 = vmatpush.msra.mxu0 0.0
    %1557 = vmatpush.msra.mxu0 0.0
    %1558 = vmatpush.msra.mxu0 0.0
    %1559 = vmatpush.msra.mxu0 0.0
    %1560 = vmatpush.msra.mxu0 0.0
    %v1561 = vand.u32 %v37, 4294901760
    %v1562 = vsub.f32 %v37, %v1561
    %1563 = vmatpush.msra.mxu0 %v1562
    %v1564 = vand.u32 %v36, 4294901760
    %v1565 = vsub.f32 %v36, %v1564
    %1566 = vmatpush.msra.mxu0 %v1565
    %v1567 = vand.u32 %v35, 4294901760
    %v1568 = vsub.f32 %v35, %v1567
    %1569 = vmatpush.msra.mxu0 %v1568
    %v1570 = vand.u32 %v34, 4294901760
    %v1571 = vsub.f32 %v34, %v1570
    %1572 = vmatpush.msra.mxu0 %v1571
    %v1573 = vand.u32 %v1477, 4294901760
    %v1574 = vsub.f32 %v1477, %v1573
    %1575 = vmatmul.f32.gmra.mxu0 %v1574
    %v1576 = vpop.f32.mrf.mxu0
    %v1577 = vadd.f32 %v1547, %v1576
    %1578 = vdwg.mxu0
    %1579 = vmatpush.msra.mxu0 0.0
    %1580 = vmatpush.msra.mxu0 0.0
    %1581 = vmatpush.msra.mxu0 0.0
    %1582 = vmatpush.msra.mxu0 0.0
    %1583 = vmatpush.msra.mxu0 0.0
    %1584 = vmatpush.msra.mxu0 0.0
    %1585 = vmatpush.msra.mxu0 0.0
    %1586 = vmatpush.msra.mxu0 0.0
    %1587 = vmatpush.msra.mxu0 0.0
    %1588 = vmatpush.msra.mxu0 0.0
    %1589 = vmatpush.msra.mxu0 0.0
    %1590 = vmatpush.msra.mxu0 0.0
    %v1591 = vand.u32 %v37, 4294901760
    %1592 = vmatpush.msra.mxu0 %v1591
    %v1593 = vand.u32 %v36, 4294901760
    %1594 = vmatpush.msra.mxu0 %v1593
    %v1595 = vand.u32 %v35, 4294901760
    %1596 = vmatpush.msra.mxu0 %v1595
    %v1597 = vand.u32 %v34, 4294901760
    %1598 = vmatpush.msra.mxu0 %v1597
    %v1599 = vand.u32 %v1477, 4294901760
    %v1600 = vsub.f32 %v1477, %v1599
    %v1601 = vand.u32 %v1600, 4294901760
    %1602 = vmatmul.f32.gmra.mxu0 %v1601
    %v1603 = vpop.f32.mrf.mxu0
    %v1604 = vadd.f32 %v1577, %v1603
    %1605 = vdwg.mxu0
    %1606 = vmatpush.msra.mxu0 0.0
    %1607 = vmatpush.msra.mxu0 0.0
    %1608 = vmatpush.msra.mxu0 0.0
    %1609 = vmatpush.msra.mxu0 0.0
    %1610 = vmatpush.msra.mxu0 0.0
    %1611 = vmatpush.msra.mxu0 0.0
    %1612 = vmatpush.msra.mxu0 0.0
    %1613 = vmatpush.msra.mxu0 0.0
    %1614 = vmatpush.msra.mxu0 0.0
    %1615 = vmatpush.msra.mxu0 0.0
    %1616 = vmatpush.msra.mxu0 0.0
    %1617 = vmatpush.msra.mxu0 0.0
    %v1618 = vand.u32 %v37, 4294901760
    %v1619 = vsub.f32 %v37, %v1618
    %v1620 = vand.u32 %v1619, 4294901760
    %1621 = vmatpush.msra.mxu0 %v1620
    %v1622 = vand.u32 %v36, 4294901760
    %v1623 = vsub.f32 %v36, %v1622
    %v1624 = vand.u32 %v1623, 4294901760
    %1625 = vmatpush.msra.mxu0 %v1624
    %v1626 = vand.u32 %v35, 4294901760
    %v1627 = vsub.f32 %v35, %v1626
    %v1628 = vand.u32 %v1627, 4294901760
    %1629 = vmatpush.msra.mxu0 %v1628
    %v1630 = vand.u32 %v34, 4294901760
    %v1631 = vsub.f32 %v34, %v1630
    %v1632 = vand.u32 %v1631, 4294901760
    %1633 = vmatpush.msra.mxu0 %v1632
    %v1634 = vand.u32 %v1477, 4294901760
    %1635 = vmatmul.f32.gmra.mxu0 %v1634
    %v1636 = vpop.f32.mrf.mxu0
    %v1637 = vadd.f32 %v1604, %v1636
    %1638 = vdwg.mxu0
    %1639 = vmatpush.msra.mxu0 0.0
    %1640 = vmatpush.msra.mxu0 0.0
    %1641 = vmatpush.msra.mxu0 0.0
    %1642 = vmatpush.msra.mxu0 0.0
    %1643 = vmatpush.msra.mxu0 0.0
    %1644 = vmatpush.msra.mxu0 0.0
    %1645 = vmatpush.msra.mxu0 0.0
    %1646 = vmatpush.msra.mxu0 0.0
    %1647 = vmatpush.msra.mxu0 0.0
    %1648 = vmatpush.msra.mxu0 0.0
    %1649 = vmatpush.msra.mxu0 0.0
    %1650 = vmatpush.msra.mxu0 0.0
    %v1651 = vand.u32 %v37, 4294901760
    %1652 = vmatpush.msra.mxu0 %v1651
    %v1653 = vand.u32 %v36, 4294901760
    %1654 = vmatpush.msra.mxu0 %v1653
    %v1655 = vand.u32 %v35, 4294901760
    %1656 = vmatpush.msra.mxu0 %v1655
    %v1657 = vand.u32 %v34, 4294901760
    %1658 = vmatpush.msra.mxu0 %v1657
    %v1659 = vand.u32 %v1477, 4294901760
    %1660 = vmatmul.f32.gmra.mxu0 %v1659
    %v1661 = vpop.f32.mrf.mxu0
    %v1662 = vadd.f32 %v1637, %v1661
    %1663 = vdwg.mxu0
    %1664 = vset.pattern.permute.xlu0 7
    %1665 = vperm.xlu0 %1664, %v32
    %v1666 = vpop.permute.xlu0 %1665
    %v1668 = vmul.f32 %v1666, %v238
    %v1669 = vadd.f32 %v1668, %v242
    %v1670 = vadd.f32 %v1669, %v1662
    %v1671 = vtanh.pop %v1670
    %v1672 = vmul.f32 %v1671, %v248
    %v1673 = vsel %vm251, %v1672, 0.0
    %1674 = vadd.xlane.f32.xlu0 %v1673
    %v1675 = vpop.xlane.xlu0 %1674
    %vm1676 = vcmp.eq.s32.totalorder %v41, 7
    %v1677 = vsel %vm1676, %v1675, 0.0
    %v1678 = vadd.f32 %v1475, %v1677
    %1679 = vst.msk [vmem:[#allocation5] sm:$0x3] %vm251, %v1671
    %v1680 = vld [vmem:[#allocation2] sm:$0x1]
    %v1682 = vperm.slane %v1680, 0
    %1683 = vset.pattern.permute.xlu0 0
    %1684 = vperm.xlu0 %1683, %v1682
    %v1685 = vpop.permute.xlu0 %1684
    %v1687 = vadd.f32 %v1678, %v1685
    %vm1688 = vcmask 58368
    %1689 = vst.msk [vmem:[#allocation3] sm:$0x3] %vm1688, %v1687
    // Predicated region
    $region30: #{rnn_forward.1} parent=1 // pred_check
      _
    $region31: #{rnn_forward.1} parent=1 // pred_check_branch
      %1691 = sbr.rel (0) target = $region33
    $region32: #{rnn_forward.1} parent=1 // pred_region
      %1693 = vsyncadd [#allocation4], 0
      %s1695 = sshll.u32 [#allocation3], 4
      %s1696 = int_to_ptr.vmem [resolvable:$true] %s1695
      %s1697 = sshll.u32 %s7, 4
      %s1698 = int_to_ptr.hbm [resolvable:$true] %s1697
      %1700 = dma.vmem_to_hbm [thread:$0]  %s1696, 32, %s1698, [#allocation4]
    $region33: #{rnn_forward.1} parent=1 // pred_fallthru
      _
    // Predicated region
    $region34: #{rnn_forward.1} parent=1 // pred_check
      _
    $region35: #{rnn_forward.1} parent=1 // pred_check_branch
      %1702 = sbr.rel (0) target = $region37
    $region36: #{rnn_forward.1} parent=1 // pred_region
      %1704 = vsyncadd [#allocation6], 0
      %s1706 = sshll.u32 [#allocation5], 4
      %s1707 = int_to_ptr.vmem [resolvable:$true] %s1706
      %s1708 = sshll.u32 %s8, 4
      %s1709 = int_to_ptr.hbm [resolvable:$true] %s1708
      %1711 = dma.vmem_to_hbm [thread:$0]  %s1707, 32, %s1709, [#allocation6]
    $region37: #{rnn_forward.1} parent=1 // pred_fallthru
      _
    // Predicated region
    $region38: #{rnn_forward.1} parent=1 // pred_check
      _
    $region39: #{rnn_forward.1} parent=1 // pred_check_branch
      %1713 = sbr.rel (0) target = $region41
    $region40: #{rnn_forward.1} parent=1 // pred_region
      %1715 = dma.done [#allocation4], 32
    $region41: #{rnn_forward.1} parent=1 // pred_fallthru
      _
    // Predicated region
    $region42: #{rnn_forward.1} parent=1 // pred_check
      _
    $region43: #{rnn_forward.1} parent=1 // pred_check_branch
      %1717 = sbr.rel (0) target = $region45
    $region44: #{rnn_forward.1} parent=1 // pred_region
      %1719 = dma.done [#allocation6], 32
    $region45: #{rnn_forward.1} parent=1 // pred_fallthru
      _
    %1720 = vsyncpa [#allocation4], 1
    %1721 = vsyncpa [#allocation6], 1

</llo_original>
